<compile_context>
chip_gen: v6e
topology: v6e:2x2x1
jax: 0.10.0
libtpu: 0.0.40
codegen_flags: <defaults>
</compile_context>

<pallas_src>
import math

import jax
import jax.numpy as jnp
from jax import lax
from jax.experimental import pallas as pl
from jax.experimental.pallas import tpu as pltpu

NUM_HEADS = 8
LN_EPS = 1e-5

_VMEM_LIMIT_BYTES = 48 * 1024 * 1024   # explicit scoped-VMEM cap (v7x-safe)
_VMEM_TILE_BUDGET = 40 * 1024 * 1024   # headroom below the cap when sizing Bt


def _mab_kernel(y_ref, x_ref,
                wq_ref, wk_ref, wv_ref,      # (H, E, Dh) head-major, W^T form
                bq_ref, bk_ref, bv_ref,      # (H, 1, Dh)
                wo_ref, bo_ref,              # (H, Dh, E), (1, E)
                wr_ref, br_ref,              # (E, E) pre-transposed, (1, E)
                gamma_ref, beta_ref,         # (1, E)
                o_ref):
    Bt, L, E = y_ref.shape
    S = x_ref.shape[1]
    cdt = wq_ref.dtype                       # MXU-operand dtype (f32 or bf16)

    # Flatten the batch tile to one tall row slab for the projections.
    # NOTE: relayout-free only when L and S are multiples of 8 (sublane).
    y2 = y_ref[...].reshape(Bt * L, E)       # f32 residual stream
    x2 = x_ref[...].reshape(Bt * S, E)
    y2c = y2.astype(cdt)
    x2c = x2.astype(cdt)

    def mm(a, w):                            # plain (M,K)x(K,N) on the MXU
        return jnp.dot(a, w, preferred_element_type=jnp.float32)

    def head_body(h, attn):
        # Head-major weights: leading-axis (dynamic) index only -> no lane
        # slices, no head-concat relayout.  wq/bq are pre-scaled by 1/sqrt(Dh).
        q = (mm(y2c, wq_ref[h]) + bq_ref[h]).reshape(Bt, L, -1)
        k = (mm(x2c, wk_ref[h]) + bk_ref[h]).reshape(Bt, S, -1)
        v = (mm(x2c, wv_ref[h]) + bv_ref[h]).reshape(Bt, S, -1)

        s = jnp.einsum("bld,bsd->bls", q.astype(cdt), k.astype(cdt),
                       preferred_element_type=jnp.float32)       # (Bt, L, S)
        m = jnp.max(s, axis=-1, keepdims=True)
        e = jnp.exp(s - m)
        p = e * pl.reciprocal(jnp.sum(e, axis=-1, keepdims=True), approx=False)
        ctx = jnp.einsum("bls,bsd->bld", p.astype(cdt), v.astype(cdt),
                         preferred_element_type=jnp.float32)      # (Bt, L, Dh)

        # Fused output projection for this head, accumulated into the carry.
        return attn + mm(ctx.reshape(Bt * L, -1).astype(cdt), wo_ref[h])

    attn = lax.fori_loop(0, NUM_HEADS, head_body,
                         jnp.zeros((Bt * L, E), jnp.float32))
    attn = attn + bo_ref[...]

    # --- residual, rFF, residual, LayerNorm (all f32) ----------------------
    h_res = attn + y2
    pre = mm(h_res.astype(cdt), wr_ref[...]) + br_ref[...] + h_res

    mean = jnp.mean(pre, axis=-1, keepdims=True)
    var = jnp.mean((pre - mean) ** 2, axis=-1, keepdims=True)
    norm = (pre - mean) * lax.rsqrt(var + LN_EPS)
    out = norm * gamma_ref[...] + beta_ref[...]
    o_ref[...] = out.reshape(Bt, L, E).astype(o_ref.dtype)


def _step_vmem_bytes(bt, L, S, E, w_itemsize):
    """Rough per-grid-step VMEM footprint for batch tile `bt` (bytes)."""
    dh = E // NUM_HEADS
    f32 = 4
    rows_l, rows_s = bt * L, bt * S
    tiles = 2 * (2 * rows_l * E + rows_s * E) * f32          # dbl-buffered Y/X/out
    weights = 5 * E * E * w_itemsize + 8 * E * f32           # single-buffered
    slabs = (6 * rows_l * E + 2 * rows_s * E) * f32          # f32 row-slab temps
    attn = (2 * bt * L * S + 2 * bt * (L + S) * dh) * f32    # per-head temps
    return tiles + weights + slabs + attn


def _pick_batch_tile(B, L, S, E, w_itemsize):
    """Batch elements folded per grid step.

    Preference order (perf review):
      1. the per-step working set fits a v7x-safe VMEM budget,
      2. the grid length is a multiple of 2 when possible (keeps both v7x
         TensorCores busy; harmless on single-core v5e/v6e),
      3. fold as much batch as possible (amortizes ~0.35us/step overhead and
         gives a tall MXU M; on v5e/v6e this tends toward 1-2 grid steps).
    """
    divisors = [d for d in range(1, B + 1) if B % d == 0]
    fitting = [d for d in divisors
               if _step_vmem_bytes(d, L, S, E, w_itemsize) <= _VMEM_TILE_BUDGET]
    if not fitting:
        fitting = [divisors[0]]
    even_grid = [d for d in fitting if (B // d) % 2 == 0]
    pool = even_grid or fitting
    return max(pool)


@jax.jit
def mab_forward(Y, X, params):
    """Y: (L, B, E), X: (S, B, E).  Returns (L, B, E)."""
    L, B, E = Y.shape
    S = X.shape[0]
    assert E % NUM_HEADS == 0
    Dh = E // NUM_HEADS
    scale = 1.0 / math.sqrt(Dh)

    # bf16 MXU operands once the matmuls dominate; f32 keeps small-E configs
    # within the 1e-4 reference tolerance.
    cdt = jnp.bfloat16 if E >= 256 else jnp.float32

    # --- host-side weight preparation (off the hot path) -------------------
    # torch Linear computes x @ W^T; pre-transpose so the kernel does plain
    # (M,K)x(K,N) contractions, and pre-split Q/K/V/O head-major so the
    # kernel never takes an unaligned sub-128 lane slice.
    def in_proj_heads(w):                       # (E, E) -> (H, E, Dh) == W_h^T
        return jnp.transpose(w.reshape(NUM_HEADS, Dh, E), (0, 2, 1))

    wq_h = (in_proj_heads(params["wq"]) * scale).astype(cdt)
    wk_h = in_proj_heads(params["wk"]).astype(cdt)
    wv_h = in_proj_heads(params["wv"]).astype(cdt)
    bq_h = (params["bq"] * scale).reshape(NUM_HEADS, 1, Dh)
    bk_h = params["bk"].reshape(NUM_HEADS, 1, Dh)
    bv_h = params["bv"].reshape(NUM_HEADS, 1, Dh)
    wo_h = params["wo"].T.reshape(NUM_HEADS, Dh, E).astype(cdt)   # (H, Dh, E)
    wrT = params["wr"].T.astype(cdt)                              # (E, E)
    bo, br = params["bo"], params["br"]
    gamma, beta = params["gamma"], params["beta"]

    Bt = _pick_batch_tile(B, L, S, E, jnp.dtype(cdt).itemsize)

    # One-time batch-major transposes (see NOTE at top of file).
    Yb = jnp.transpose(Y, (1, 0, 2))   # (B, L, E)
    Xb = jnp.transpose(X, (1, 0, 2))   # (B, S, E)

    def resident(shape):
        """Grid-invariant block: constant index_map + single-buffered."""
        idx = lambda *_: (0,) * len(shape)
        try:
            return pl.BlockSpec(shape, idx, pipeline_mode=pl.Buffered(1))
        except TypeError:              # older JAX without pipeline_mode kwarg
            return pl.BlockSpec(shape, idx)

    out = pl.pallas_call(
        _mab_kernel,
        out_shape=jax.ShapeDtypeStruct((B, L, E), jnp.float32),
        grid_spec=pltpu.PrefetchScalarGridSpec(
            num_scalar_prefetch=0,
            grid=(B // Bt,),
            in_specs=[
                pl.BlockSpec((Bt, L, E), lambda b: (b, 0, 0)),   # Y tile
                pl.BlockSpec((Bt, S, E), lambda b: (b, 0, 0)),   # X tile
                resident((NUM_HEADS, E, Dh)),                    # wq_h
                resident((NUM_HEADS, E, Dh)),                    # wk_h
                resident((NUM_HEADS, E, Dh)),                    # wv_h
                resident((NUM_HEADS, 1, Dh)),                    # bq_h
                resident((NUM_HEADS, 1, Dh)),                    # bk_h
                resident((NUM_HEADS, 1, Dh)),                    # bv_h
                resident((NUM_HEADS, Dh, E)),                    # wo_h
                resident((1, E)),                                # bo
                resident((E, E)),                                # wrT
                resident((1, E)),                                # br
                resident((1, E)),                                # gamma
                resident((1, E)),                                # beta
            ],
            out_specs=pl.BlockSpec((Bt, L, E), lambda b: (b, 0, 0)),
        ),
        compiler_params=pltpu.CompilerParams(
            dimension_semantics=("parallel",),
            vmem_limit_bytes=_VMEM_LIMIT_BYTES),
    )(Yb, Xb, wq_h, wk_h, wv_h, bq_h, bk_h, bv_h, wo_h, bo, wrT, br,
      gamma, beta)

    return jnp.transpose(out, (1, 0, 2))          # back to (L, B, E)


def make_params(key, E):
    ks = jax.random.split(key, 10)
    scale = 0.1
    return {
        "wq": scale * jax.random.normal(ks[0], (E, E), jnp.float32),
        "wk": scale * jax.random.normal(ks[1], (E, E), jnp.float32),
        "wv": scale * jax.random.normal(ks[2], (E, E), jnp.float32),
        "bq": scale * jax.random.normal(ks[3], (1, E), jnp.float32),
        "bk": scale * jax.random.normal(ks[4], (1, E), jnp.float32),
        "bv": scale * jax.random.normal(ks[5], (1, E), jnp.float32),
        "wo": scale * jax.random.normal(ks[6], (E, E), jnp.float32),
        "bo": scale * jax.random.normal(ks[7], (1, E), jnp.float32),
        "wr": scale * jax.random.normal(ks[8], (E, E), jnp.float32),
        "br": scale * jax.random.normal(ks[9], (1, E), jnp.float32),
        "gamma": jnp.ones((1, E), jnp.float32),
        "beta": jnp.zeros((1, E), jnp.float32),
    }


def mab_reference(Y, X, params):
    """Pure-JAX reference matching nn.MultiheadAttention semantics."""
    L, B, E = Y.shape
    S = X.shape[0]
    Dh = E // NUM_HEADS
    lin = lambda x, w, b: x @ w.T + b[0]
    Q = lin(Y, params["wq"], params["bq"])
    K = lin(X, params["wk"], params["bk"])
    V = lin(X, params["wv"], params["bv"])
    r = lambda t, n: jnp.transpose(t.reshape(n, B, NUM_HEADS, Dh), (1, 2, 0, 3))
    Qh, Kh, Vh = r(Q, L), r(K, S), r(V, S)
    s = jnp.einsum("bhld,bhsd->bhls", Qh / math.sqrt(Dh), Kh)
    p = jax.nn.softmax(s, axis=-1)
    ctx = jnp.einsum("bhls,bhsd->bhld", p, Vh)
    ctx = jnp.transpose(ctx, (2, 0, 1, 3)).reshape(L, B, E)
    attn_out = lin(ctx, params["wo"], params["bo"])
    H = attn_out + Y
    pre = lin(H, params["wr"], params["br"]) + H
    mean = jnp.mean(pre, -1, keepdims=True)
    var = jnp.mean((pre - mean) ** 2, -1, keepdims=True)
    return (pre - mean) * jax.lax.rsqrt(var + LN_EPS) * params["gamma"][0] \
        + params["beta"][0]


if __name__ == "__main__":
    key = jax.random.PRNGKey(0)
    k1, k2, k3, k4, k5, k6 = jax.random.split(key, 6)

    # Config 1: module-default small sizes (Bt=1, grid=2).
    E, L, S, B = 32, 8, 8, 2
    Y = jax.random.normal(k1, (L, B, E), jnp.float32)
    X = jax.random.normal(k2, (S, B, E), jnp.float32)
    params = make_params(k3, E)
    out = jax.block_until_ready(mab_forward(Y, X, params))
    ref = mab_reference(Y, X, params)
    assert out.shape == (L, B, E)
    assert jnp.allclose(out, ref, rtol=1e-4, atol=1e-4), (
        float(jnp.max(jnp.abs(out - ref))))

    # Config 2: exercises the batch-folded path (Bt=2, grid=2 -> even grid).
    E2, L2, S2, B2 = 32, 8, 16, 4
    Y2 = jax.random.normal(k4, (L2, B2, E2), jnp.float32)
    X2 = jax.random.normal(k5, (S2, B2, E2), jnp.float32)
    params2 = make_params(k6, E2)
    out2 = jax.block_until_ready(mab_forward(Y2, X2, params2))
    ref2 = mab_reference(Y2, X2, params2)
    assert jnp.allclose(out2, ref2, rtol=1e-4, atol=1e-4), (
        float(jnp.max(jnp.abs(out2 - ref2))))

    print("KERNEL_OK")
</pallas_src>

<mosaic_0001>
module attributes {stable_mosaic.version = 11 : i64} {
  func.func @_mab_kernel(%arg0: i32, %arg1: memref<1x8x32xf32, #tpu.memory_space<vmem>>, %arg2: memref<1x8x32xf32, #tpu.memory_space<vmem>>, %arg3: memref<8x32x4xf32, #tpu.memory_space<vmem>>, %arg4: memref<8x32x4xf32, #tpu.memory_space<vmem>>, %arg5: memref<8x32x4xf32, #tpu.memory_space<vmem>>, %arg6: memref<8x1x4xf32, #tpu.memory_space<vmem>>, %arg7: memref<8x1x4xf32, #tpu.memory_space<vmem>>, %arg8: memref<8x1x4xf32, #tpu.memory_space<vmem>>, %arg9: memref<8x4x32xf32, #tpu.memory_space<vmem>>, %arg10: memref<1x32xf32, #tpu.memory_space<vmem>>, %arg11: memref<32x32xf32, #tpu.memory_space<vmem>>, %arg12: memref<1x32xf32, #tpu.memory_space<vmem>>, %arg13: memref<1x32xf32, #tpu.memory_space<vmem>>, %arg14: memref<1x32xf32, #tpu.memory_space<vmem>>, %arg15: memref<1x8x32xf32, #tpu.memory_space<vmem>>) attributes {dimension_semantics = [#tpu.dimension_semantics<parallel>], iteration_bounds = array<i64: 2>, scalar_prefetch = 0 : i64, scratch_operands = 0 : i64, tpu.core_type = #tpu.core_type<tc>, window_params = [{transform_indices = @transform_0, window_bounds = array<i64: 1, 8, 32>}, {transform_indices = @transform_1, window_bounds = array<i64: 1, 8, 32>}, {pipeline_mode = #tpu.pipeline_mode<synchronous>, transform_indices = @transform_2, window_bounds = array<i64: 8, 32, 4>}, {pipeline_mode = #tpu.pipeline_mode<synchronous>, transform_indices = @transform_3, window_bounds = array<i64: 8, 32, 4>}, {pipeline_mode = #tpu.pipeline_mode<synchronous>, transform_indices = @transform_4, window_bounds = array<i64: 8, 32, 4>}, {pipeline_mode = #tpu.pipeline_mode<synchronous>, transform_indices = @transform_5, window_bounds = array<i64: 8, 1, 4>}, {pipeline_mode = #tpu.pipeline_mode<synchronous>, transform_indices = @transform_6, window_bounds = array<i64: 8, 1, 4>}, {pipeline_mode = #tpu.pipeline_mode<synchronous>, transform_indices = @transform_7, window_bounds = array<i64: 8, 1, 4>}, {pipeline_mode = #tpu.pipeline_mode<synchronous>, transform_indices = @transform_8, window_bounds = array<i64: 8, 4, 32>}, {pipeline_mode = #tpu.pipeline_mode<synchronous>, transform_indices = @transform_9, window_bounds = array<i64: 1, 32>}, {pipeline_mode = #tpu.pipeline_mode<synchronous>, transform_indices = @transform_10, window_bounds = array<i64: 32, 32>}, {pipeline_mode = #tpu.pipeline_mode<synchronous>, transform_indices = @transform_11, window_bounds = array<i64: 1, 32>}, {pipeline_mode = #tpu.pipeline_mode<synchronous>, transform_indices = @transform_12, window_bounds = array<i64: 1, 32>}, {pipeline_mode = #tpu.pipeline_mode<synchronous>, transform_indices = @transform_13, window_bounds = array<i64: 1, 32>}, {transform_indices = @transform_14, window_bounds = array<i64: 1, 8, 32>}]} {
    %c0 = arith.constant 0 : index
    %c0_0 = arith.constant 0 : index
    %c0_1 = arith.constant 0 : index
    %0 = vector.load %arg1[%c0, %c0_0, %c0_1] : memref<1x8x32xf32, #tpu.memory_space<vmem>>, vector<1x8x32xf32>
    %1 = vector.shape_cast %0 : vector<1x8x32xf32> to vector<8x32xf32>
    %c0_2 = arith.constant 0 : index
    %c0_3 = arith.constant 0 : index
    %c0_4 = arith.constant 0 : index
    %2 = vector.load %arg2[%c0_2, %c0_3, %c0_4] : memref<1x8x32xf32, #tpu.memory_space<vmem>>, vector<1x8x32xf32>
    %3 = vector.shape_cast %2 : vector<1x8x32xf32> to vector<8x32xf32>
    %cst = arith.constant 0.000000e+00 : f32
    %4 = vector.broadcast %cst : f32 to vector<8x32xf32>
    %c0_i32 = arith.constant 0 : i32
    %c8_i32 = arith.constant 8 : i32
    %5 = arith.addi %c0_i32, %c8_i32 : i32
    %c1_i32 = arith.constant 1 : i32
    %6 = scf.for %arg16 = %c0_i32 to %5 step %c1_i32 iter_args(%arg17 = %4) -> (vector<8x32xf32>)  : i32 {
      %43 = arith.index_cast %arg16 : i32 to index
      %c0_25 = arith.constant 0 : index
      %c0_26 = arith.constant 0 : index
      %44 = vector.load %arg3[%43, %c0_25, %c0_26] : memref<8x32x4xf32, #tpu.memory_space<vmem>>, vector<1x32x4xf32>
      %45 = vector.shape_cast %44 : vector<1x32x4xf32> to vector<32x4xf32>
      %cst_27 = arith.constant dense<0.000000e+00> : vector<8x4xf32>
      %46 = tpu.matmul %1, %45, %cst_27 {dimension_numbers = #tpu.dot_dimension_numbers<[1], [0], [0], [1], [0, 0, 1, 1], [], []>} : vector<8x32xf32>, vector<32x4xf32>, vector<8x4xf32> -> vector<8x4xf32>
      %47 = arith.index_cast %arg16 : i32 to index
      %c0_28 = arith.constant 0 : index
      %c0_29 = arith.constant 0 : index
      %48 = vector.load %arg6[%47, %c0_28, %c0_29] : memref<8x1x4xf32, #tpu.memory_space<vmem>>, vector<1x1x4xf32>
      %49 = vector.shape_cast %48 : vector<1x1x4xf32> to vector<1x4xf32>
      %50 = vector.broadcast %49 : vector<1x4xf32> to vector<8x4xf32>
      %51 = arith.addf %46, %50 : vector<8x4xf32>
      %52 = vector.shape_cast %51 : vector<8x4xf32> to vector<1x8x4xf32>
      %53 = arith.index_cast %arg16 : i32 to index
      %c0_30 = arith.constant 0 : index
      %c0_31 = arith.constant 0 : index
      %54 = vector.load %arg4[%53, %c0_30, %c0_31] : memref<8x32x4xf32, #tpu.memory_space<vmem>>, vector<1x32x4xf32>
      %55 = vector.shape_cast %54 : vector<1x32x4xf32> to vector<32x4xf32>
      %cst_32 = arith.constant dense<0.000000e+00> : vector<8x4xf32>
      %56 = tpu.matmul %3, %55, %cst_32 {dimension_numbers = #tpu.dot_dimension_numbers<[1], [0], [0], [1], [0, 0, 1, 1], [], []>} : vector<8x32xf32>, vector<32x4xf32>, vector<8x4xf32> -> vector<8x4xf32>
      %57 = arith.index_cast %arg16 : i32 to index
      %c0_33 = arith.constant 0 : index
      %c0_34 = arith.constant 0 : index
      %58 = vector.load %arg7[%57, %c0_33, %c0_34] : memref<8x1x4xf32, #tpu.memory_space<vmem>>, vector<1x1x4xf32>
      %59 = vector.shape_cast %58 : vector<1x1x4xf32> to vector<1x4xf32>
      %60 = vector.broadcast %59 : vector<1x4xf32> to vector<8x4xf32>
      %61 = arith.addf %56, %60 : vector<8x4xf32>
      %62 = vector.shape_cast %61 : vector<8x4xf32> to vector<1x8x4xf32>
      %63 = arith.index_cast %arg16 : i32 to index
      %c0_35 = arith.constant 0 : index
      %c0_36 = arith.constant 0 : index
      %64 = vector.load %arg5[%63, %c0_35, %c0_36] : memref<8x32x4xf32, #tpu.memory_space<vmem>>, vector<1x32x4xf32>
      %65 = vector.shape_cast %64 : vector<1x32x4xf32> to vector<32x4xf32>
      %cst_37 = arith.constant dense<0.000000e+00> : vector<8x4xf32>
      %66 = tpu.matmul %3, %65, %cst_37 {dimension_numbers = #tpu.dot_dimension_numbers<[1], [0], [0], [1], [0, 0, 1, 1], [], []>} : vector<8x32xf32>, vector<32x4xf32>, vector<8x4xf32> -> vector<8x4xf32>
      %67 = arith.index_cast %arg16 : i32 to index
      %c0_38 = arith.constant 0 : index
      %c0_39 = arith.constant 0 : index
      %68 = vector.load %arg8[%67, %c0_38, %c0_39] : memref<8x1x4xf32, #tpu.memory_space<vmem>>, vector<1x1x4xf32>
      %69 = vector.shape_cast %68 : vector<1x1x4xf32> to vector<1x4xf32>
      %70 = vector.broadcast %69 : vector<1x4xf32> to vector<8x4xf32>
      %71 = arith.addf %66, %70 : vector<8x4xf32>
      %72 = vector.shape_cast %71 : vector<8x4xf32> to vector<1x8x4xf32>
      "tpu.trace_start"() <{level = 10 : i32, message = "bld,bsd->bls"}> : () -> ()
      %cst_40 = arith.constant dense<0.000000e+00> : vector<1x8x8xf32>
      %73 = tpu.matmul %52, %62, %cst_40 {dimension_numbers = #tpu.dot_dimension_numbers<[2], [2], [1], [1], [0, 0, 0, 1, 1, 1], [0], [0]>} : vector<1x8x4xf32>, vector<1x8x4xf32>, vector<1x8x8xf32> -> vector<1x8x8xf32>
      "tpu.trace_stop"() : () -> ()
      %cst_41 = arith.constant dense<0xFF800000> : vector<1x8xf32>
      %74 = vector.multi_reduction <maximumf>, %73, %cst_41 [2] : vector<1x8x8xf32> to vector<1x8xf32>
      %75 = vector.shape_cast %74 : vector<1x8xf32> to vector<1x8x1xf32>
      %76 = vector.broadcast %75 : vector<1x8x1xf32> to vector<1x8x8xf32>
      %77 = arith.subf %73, %76 : vector<1x8x8xf32>
      %78 = math.exp %77 : vector<1x8x8xf32>
      %cst_42 = arith.constant dense<0.000000e+00> : vector<1x8xf32>
      %79 = vector.multi_reduction <add>, %78, %cst_42 [2] : vector<1x8x8xf32> to vector<1x8xf32>
      %80 = vector.shape_cast %79 : vector<1x8xf32> to vector<1x8x1xf32>
      %81 = tpu.reciprocal %80 : vector<1x8x1xf32> -> vector<1x8x1xf32>
      %82 = vector.broadcast %81 : vector<1x8x1xf32> to vector<1x8x8xf32>
      %83 = arith.mulf %78, %82 : vector<1x8x8xf32>
      "tpu.trace_start"() <{level = 10 : i32, message = "bls,bsd->bld"}> : () -> ()
      %cst_43 = arith.constant dense<0.000000e+00> : vector<1x8x4xf32>
      %84 = tpu.matmul %83, %72, %cst_43 {dimension_numbers = #tpu.dot_dimension_numbers<[2], [1], [1], [2], [0, 0, 0, 1, 1, 2], [0], [0]>} : vector<1x8x8xf32>, vector<1x8x4xf32>, vector<1x8x4xf32> -> vector<1x8x4xf32>
      "tpu.trace_stop"() : () -> ()
      %85 = vector.shape_cast %84 : vector<1x8x4xf32> to vector<8x4xf32>
      %86 = arith.index_cast %arg16 : i32 to index
      %c0_44 = arith.constant 0 : index
      %c0_45 = arith.constant 0 : index
      %87 = vector.load %arg9[%86, %c0_44, %c0_45] : memref<8x4x32xf32, #tpu.memory_space<vmem>>, vector<1x4x32xf32>
      %88 = vector.shape_cast %87 : vector<1x4x32xf32> to vector<4x32xf32>
      %cst_46 = arith.constant dense<0.000000e+00> : vector<8x32xf32>
      %89 = tpu.matmul %85, %88, %cst_46 {dimension_numbers = #tpu.dot_dimension_numbers<[1], [0], [0], [1], [0, 0, 1, 1], [], []>} : vector<8x4xf32>, vector<4x32xf32>, vector<8x32xf32> -> vector<8x32xf32>
      %90 = arith.addf %arg17, %89 : vector<8x32xf32>
      scf.yield %90 : vector<8x32xf32>
    }
    %c8_i32_5 = arith.constant 8 : i32
    %c0_6 = arith.constant 0 : index
    %c0_7 = arith.constant 0 : index
    %7 = vector.load %arg10[%c0_6, %c0_7] : memref<1x32xf32, #tpu.memory_space<vmem>>, vector<1x32xf32>
    %8 = vector.broadcast %7 : vector<1x32xf32> to vector<8x32xf32>
    %9 = arith.addf %6, %8 : vector<8x32xf32>
    %10 = arith.addf %9, %1 : vector<8x32xf32>
    %c0_8 = arith.constant 0 : index
    %c0_9 = arith.constant 0 : index
    %11 = vector.load %arg11[%c0_8, %c0_9] : memref<32x32xf32, #tpu.memory_space<vmem>>, vector<32x32xf32>
    %cst_10 = arith.constant dense<0.000000e+00> : vector<8x32xf32>
    %12 = tpu.matmul %10, %11, %cst_10 {dimension_numbers = #tpu.dot_dimension_numbers<[1], [0], [0], [1], [0, 0, 1, 1], [], []>} : vector<8x32xf32>, vector<32x32xf32>, vector<8x32xf32> -> vector<8x32xf32>
    %c0_11 = arith.constant 0 : index
    %c0_12 = arith.constant 0 : index
    %13 = vector.load %arg12[%c0_11, %c0_12] : memref<1x32xf32, #tpu.memory_space<vmem>>, vector<1x32xf32>
    %14 = vector.broadcast %13 : vector<1x32xf32> to vector<8x32xf32>
    %15 = arith.addf %12, %14 : vector<8x32xf32>
    %16 = arith.addf %15, %10 : vector<8x32xf32>
    %cst_13 = arith.constant dense<0.000000e+00> : vector<8xf32>
    %17 = vector.multi_reduction <add>, %16, %cst_13 [1] : vector<8x32xf32> to vector<8xf32>
    %18 = vector.shape_cast %17 : vector<8xf32> to vector<8x1xf32>
    %cst_14 = arith.constant 3.200000e+01 : f32
    %19 = vector.broadcast %cst_14 : f32 to vector<8x1xf32>
    %20 = arith.divf %18, %19 : vector<8x1xf32>
    %21 = vector.broadcast %20 : vector<8x1xf32> to vector<8x32xf32>
    %22 = arith.subf %16, %21 : vector<8x32xf32>
    %23 = arith.mulf %22, %22 : vector<8x32xf32>
    %cst_15 = arith.constant dense<0.000000e+00> : vector<8xf32>
    %24 = vector.multi_reduction <add>, %23, %cst_15 [1] : vector<8x32xf32> to vector<8xf32>
    %25 = vector.shape_cast %24 : vector<8xf32> to vector<8x1xf32>
    %cst_16 = arith.constant 3.200000e+01 : f32
    %26 = vector.broadcast %cst_16 : f32 to vector<8x1xf32>
    %27 = arith.divf %25, %26 : vector<8x1xf32>
    %28 = vector.broadcast %20 : vector<8x1xf32> to vector<8x32xf32>
    %29 = arith.subf %16, %28 : vector<8x32xf32>
    %cst_17 = arith.constant 9.99999974E-6 : f32
    %30 = vector.broadcast %cst_17 : f32 to vector<8x1xf32>
    %31 = arith.addf %27, %30 : vector<8x1xf32>
    %32 = math.rsqrt %31 : vector<8x1xf32>
    %33 = vector.broadcast %32 : vector<8x1xf32> to vector<8x32xf32>
    %34 = arith.mulf %29, %33 : vector<8x32xf32>
    %c0_18 = arith.constant 0 : index
    %c0_19 = arith.constant 0 : index
    %35 = vector.load %arg13[%c0_18, %c0_19] : memref<1x32xf32, #tpu.memory_space<vmem>>, vector<1x32xf32>
    %36 = vector.broadcast %35 : vector<1x32xf32> to vector<8x32xf32>
    %37 = arith.mulf %34, %36 : vector<8x32xf32>
    %c0_20 = arith.constant 0 : index
    %c0_21 = arith.constant 0 : index
    %38 = vector.load %arg14[%c0_20, %c0_21] : memref<1x32xf32, #tpu.memory_space<vmem>>, vector<1x32xf32>
    %39 = vector.broadcast %38 : vector<1x32xf32> to vector<8x32xf32>
    %40 = arith.addf %37, %39 : vector<8x32xf32>
    %41 = vector.shape_cast %40 : vector<8x32xf32> to vector<1x8x32xf32>
    %c0_22 = arith.constant 0 : index
    %c0_23 = arith.constant 0 : index
    %c0_24 = arith.constant 0 : index
    %42 = vector.load %arg15[%c0_22, %c0_23, %c0_24] : memref<1x8x32xf32, #tpu.memory_space<vmem>>, vector<1x8x32xf32>
    tpu.vector_store %arg15[%c0_22, %c0_23, %c0_24], %41 {strides = array<i32>} : memref<1x8x32xf32, #tpu.memory_space<vmem>>, vector<1x8x32xf32>,
    return
  }
  func.func @transform_0(%arg0: i32) -> (i32, i32, i32) {
    %c0_i32 = arith.constant 0 : i32
    %c0_i32_0 = arith.constant 0 : i32
    %c0_i32_1 = arith.constant 0 : i32
    return %arg0, %c0_i32, %c0_i32_0 : i32, i32, i32
  }
  func.func @transform_1(%arg0: i32) -> (i32, i32, i32) {
    %c0_i32 = arith.constant 0 : i32
    %c0_i32_0 = arith.constant 0 : i32
    %c0_i32_1 = arith.constant 0 : i32
    return %arg0, %c0_i32, %c0_i32_0 : i32, i32, i32
  }
  func.func @transform_2(%arg0: i32) -> (i32, i32, i32) {
    %c0_i32 = arith.constant 0 : i32
    %c0_i32_0 = arith.constant 0 : i32
    %c0_i32_1 = arith.constant 0 : i32
    %c0_i32_2 = arith.constant 0 : i32
    return %c0_i32, %c0_i32_0, %c0_i32_1 : i32, i32, i32
  }
  func.func @transform_3(%arg0: i32) -> (i32, i32, i32) {
    %c0_i32 = arith.constant 0 : i32
    %c0_i32_0 = arith.constant 0 : i32
    %c0_i32_1 = arith.constant 0 : i32
    %c0_i32_2 = arith.constant 0 : i32
    return %c0_i32, %c0_i32_0, %c0_i32_1 : i32, i32, i32
  }
  func.func @transform_4(%arg0: i32) -> (i32, i32, i32) {
    %c0_i32 = arith.constant 0 : i32
    %c0_i32_0 = arith.constant 0 : i32
    %c0_i32_1 = arith.constant 0 : i32
    %c0_i32_2 = arith.constant 0 : i32
    return %c0_i32, %c0_i32_0, %c0_i32_1 : i32, i32, i32
  }
  func.func @transform_5(%arg0: i32) -> (i32, i32, i32) {
    %c0_i32 = arith.constant 0 : i32
    %c0_i32_0 = arith.constant 0 : i32
    %c0_i32_1 = arith.constant 0 : i32
    %c0_i32_2 = arith.constant 0 : i32
    return %c0_i32, %c0_i32_0, %c0_i32_1 : i32, i32, i32
  }
  func.func @transform_6(%arg0: i32) -> (i32, i32, i32) {
    %c0_i32 = arith.constant 0 : i32
    %c0_i32_0 = arith.constant 0 : i32
    %c0_i32_1 = arith.constant 0 : i32
    %c0_i32_2 = arith.constant 0 : i32
    return %c0_i32, %c0_i32_0, %c0_i32_1 : i32, i32, i32
  }
  func.func @transform_7(%arg0: i32) -> (i32, i32, i32) {
    %c0_i32 = arith.constant 0 : i32
    %c0_i32_0 = arith.constant 0 : i32
    %c0_i32_1 = arith.constant 0 : i32
    %c0_i32_2 = arith.constant 0 : i32
    return %c0_i32, %c0_i32_0, %c0_i32_1 : i32, i32, i32
  }
  func.func @transform_8(%arg0: i32) -> (i32, i32, i32) {
    %c0_i32 = arith.constant 0 : i32
    %c0_i32_0 = arith.constant 0 : i32
    %c0_i32_1 = arith.constant 0 : i32
    %c0_i32_2 = arith.constant 0 : i32
    return %c0_i32, %c0_i32_0, %c0_i32_1 : i32, i32, i32
  }
  func.func @transform_9(%arg0: i32) -> (i32, i32) {
    %c0_i32 = arith.constant 0 : i32
    %c0_i32_0 = arith.constant 0 : i32
    %c0_i32_1 = arith.constant 0 : i32
    return %c0_i32, %c0_i32_0 : i32, i32
  }
  func.func @transform_10(%arg0: i32) -> (i32, i32) {
    %c0_i32 = arith.constant 0 : i32
    %c0_i32_0 = arith.constant 0 : i32
    %c0_i32_1 = arith.constant 0 : i32
    return %c0_i32, %c0_i32_0 : i32, i32
  }
  func.func @transform_11(%arg0: i32) -> (i32, i32) {
    %c0_i32 = arith.constant 0 : i32
    %c0_i32_0 = arith.constant 0 : i32
    %c0_i32_1 = arith.constant 0 : i32
    return %c0_i32, %c0_i32_0 : i32, i32
  }
  func.func @transform_12(%arg0: i32) -> (i32, i32) {
    %c0_i32 = arith.constant 0 : i32
    %c0_i32_0 = arith.constant 0 : i32
    %c0_i32_1 = arith.constant 0 : i32
    return %c0_i32, %c0_i32_0 : i32, i32
  }
  func.func @transform_13(%arg0: i32) -> (i32, i32) {
    %c0_i32 = arith.constant 0 : i32
    %c0_i32_0 = arith.constant 0 : i32
    %c0_i32_1 = arith.constant 0 : i32
    return %c0_i32, %c0_i32_0 : i32, i32
  }
  func.func @transform_14(%arg0: i32) -> (i32, i32, i32) {
    %c0_i32 = arith.constant 0 : i32
    %c0_i32_0 = arith.constant 0 : i32
    %c0_i32_1 = arith.constant 0 : i32
    return %arg0, %c0_i32, %c0_i32_0 : i32, i32, i32
  }
}

</mosaic_0001>

<llo_original>
// kernel: mab_forward.1
$region0: #{mab_forward.1}
  #allocation0 [shape = 'u32[]', space=smem, size = 0x4, offset = 0x4, fixed_abs, tag = 'smem constant byte address 0x4 - core index']
  #allocation1 [shape = 'u32[144,128]{1,0:T(1,128)}', space=vmem, size = 0x12000, scoped, tag = 'internal scratch']
  %s0 = inlined_call_operand.vmem [shape: f32[2,8,32], index: 0, kind: input, shape index: {}]
  %s1 = inlined_call_operand.vmem [shape: f32[2,8,32], index: 1, kind: input, shape index: {}]
  %s2 = inlined_call_operand.vmem [shape: f32[8,32,4], index: 2, kind: input, shape index: {}]
  %s3 = inlined_call_operand.vmem [shape: f32[8,32,4], index: 3, kind: input, shape index: {}]
  %s4 = inlined_call_operand.vmem [shape: f32[8,32,4], index: 4, kind: input, shape index: {}]
  %s5 = inlined_call_operand.vmem [shape: f32[8,1,4], index: 5, kind: input, shape index: {}]
  %s6 = inlined_call_operand.vmem [shape: f32[8,1,4], index: 6, kind: input, shape index: {}]
  %s7 = inlined_call_operand.vmem [shape: f32[8,1,4], index: 7, kind: input, shape index: {}]
  %s8 = inlined_call_operand.vmem [shape: f32[8,4,32], index: 8, kind: input, shape index: {}]
  %s9 = inlined_call_operand.vmem [shape: f32[1,32], index: 9, kind: input, shape index: {}]
  %s10 = inlined_call_operand.vmem [shape: f32[32,32], index: 10, kind: input, shape index: {}]
  %s11 = inlined_call_operand.vmem [shape: f32[1,32], index: 11, kind: input, shape index: {}]
  %s12 = inlined_call_operand.vmem [shape: f32[1,32], index: 12, kind: input, shape index: {}]
  %s13 = inlined_call_operand.vmem [shape: f32[1,32], index: 13, kind: input, shape index: {}]
  %s14 = inlined_call_operand.vmem [shape: f32[2,8,32], index: 14, kind: output, shape index: {}]
  %s15 = sld [smem:[#allocation0]]
  $region96: #{mab_forward.1} parent=0
    _
  %s17 = ssub.s32 1, %s15
  %s18 = scalar_select 0, %s17, %s15
  loop: start=0, step=1, limit=4
  $region2: #{mab_forward.1} parent=0 // loop_pre_header
    _
  $region3: #{mab_forward.1} parent=0 // loop_header
    %s20 = sphi 0, %s24
    %p21 = scmp.ge.s32.totalorder %s20, 4
    %s30 = sphi 0, %s32
    %s33 = sphi 0, %s30
    %s34 = sphi 0, %s33
    %s50 = sphi 0, %s34
    %s56 = sphi 0, %s58
    %s59 = sphi 0, %s56
    %s60 = sphi 0, %s59
    %s76 = sphi 0, %s60
    %s80 = sphi 0, %s80
    %s82 = sphi 0, %s80
    %s83 = sphi 0, %s82
    %s97 = sphi 0, %s83
    %s101 = sphi 0, %s101
    %s103 = sphi 0, %s101
    %s104 = sphi 0, %s103
    %s118 = sphi 0, %s104
    %s122 = sphi 0, %s122
    %s124 = sphi 0, %s122
    %s125 = sphi 0, %s124
    %s139 = sphi 0, %s125
    %s143 = sphi 0, %s143
    %s145 = sphi 0, %s143
    %s146 = sphi 0, %s145
    %s160 = sphi 0, %s146
    %s164 = sphi 0, %s164
    %s166 = sphi 0, %s164
    %s167 = sphi 0, %s166
    %s181 = sphi 0, %s167
    %s185 = sphi 0, %s185
    %s187 = sphi 0, %s185
    %s188 = sphi 0, %s187
    %s202 = sphi 0, %s188
    %s206 = sphi 0, %s206
    %s208 = sphi 0, %s206
    %s209 = sphi 0, %s208
    %s223 = sphi 0, %s209
    %s227 = sphi 0, %s227
    %s229 = sphi 0, %s227
    %s230 = sphi 0, %s229
    %s244 = sphi 0, %s230
    %s248 = sphi 0, %s248
    %s250 = sphi 0, %s248
    %s251 = sphi 0, %s250
    %s265 = sphi 0, %s251
    %s269 = sphi 0, %s269
    %s271 = sphi 0, %s269
    %s272 = sphi 0, %s271
    %s286 = sphi 0, %s272
    %s290 = sphi 0, %s290
    %s292 = sphi 0, %s290
    %s293 = sphi 0, %s292
    %s307 = sphi 0, %s293
    %s311 = sphi 0, %s311
    %s313 = sphi 0, %s311
    %s314 = sphi 0, %s313
    %s328 = sphi 0, %s314
    %s334 = sphi 0, %s336
    %s337 = sphi 0, %s334
    %s338 = sphi 0, %s337
    %s354 = sphi 0, %s338
  $region4: #{mab_forward.1} parent=0 // loop_header_branch
    %23 = sbr.rel (%p21) target = $region8
  $region5: #{mab_forward.1} parent=0 // loop_body
    %s25 = ssub.s32 %s20, 1
    %s26 = ssub.s32 %s20, 2
    %s27 = sadd.s32 %s20, 1
    %s28 = ssub.s32 %s20, %s27
    %p29 = scmp.eq.s32.totalorder %s28, 0
    %s31 = sadd.s32 %s30, 1
    %s32 = scalar_select %p29, %s30, %s31
    %p35 = pneg %p29
    %p36 = scmp.eq.s32.totalorder %s20, 1
    %p37 = por %p35, %p36
    %p38 = scmp.ne.s32.totalorder %s30, %s33
    %p39 = scmp.eq.s32.totalorder %s20, 0
    %p40 = por %p38, %p39
    %p41 = scmp.ne.s32.totalorder %s30, %s33
    %p42 = scmp.eq.s32.totalorder %s25, 1
    %p43 = por %p41, %p42
    %p44 = scmp.ne.s32.totalorder %s33, %s34
    %p45 = scmp.eq.s32.totalorder %s25, 0
    %p46 = por %p44, %p45
    %p47 = scmp.ne.s32.totalorder %s33, %s34
    %p48 = scmp.eq.s32.totalorder %s26, 1
    %p49 = por %p47, %p48
    %p51 = scmp.ne.s32.totalorder %s34, %s50
    %p52 = scmp.eq.s32.totalorder %s26, 0
    %p53 = por %p51, %p52
    %s54 = ssub.s32 %s20, %s27
    %p55 = scmp.eq.s32.totalorder %s54, 0
    %s57 = sadd.s32 %s56, 1
    %s58 = scalar_select %p55, %s56, %s57
    %p61 = pneg %p55
    %p62 = scmp.eq.s32.totalorder %s20, 1
    %p63 = por %p61, %p62
    %p64 = scmp.ne.s32.totalorder %s56, %s59
    %p65 = scmp.eq.s32.totalorder %s20, 0
    %p66 = por %p64, %p65
    %p67 = scmp.ne.s32.totalorder %s56, %s59
    %p68 = scmp.eq.s32.totalorder %s25, 1
    %p69 = por %p67, %p68
    %p70 = scmp.ne.s32.totalorder %s59, %s60
    %p71 = scmp.eq.s32.totalorder %s25, 0
    %p72 = por %p70, %p71
    %p73 = scmp.ne.s32.totalorder %s59, %s60
    %p74 = scmp.eq.s32.totalorder %s26, 1
    %p75 = por %p73, %p74
    %p77 = scmp.ne.s32.totalorder %s60, %s76
    %p78 = scmp.eq.s32.totalorder %s26, 0
    %p79 = por %p77, %p78
    %s81 = sadd.s32 %s80, 1
    %p84 = scmp.eq.s32.totalorder %s20, 1
    %p85 = scmp.ne.s32.totalorder %s80, %s82
    %p86 = scmp.eq.s32.totalorder %s20, 0
    %p87 = por %p85, %p86
    %p88 = scmp.ne.s32.totalorder %s80, %s82
    %p89 = scmp.eq.s32.totalorder %s25, 1
    %p90 = por %p88, %p89
    %p91 = scmp.ne.s32.totalorder %s82, %s83
    %p92 = scmp.eq.s32.totalorder %s25, 0
    %p93 = por %p91, %p92
    %p94 = scmp.ne.s32.totalorder %s82, %s83
    %p95 = scmp.eq.s32.totalorder %s26, 1
    %p96 = por %p94, %p95
    %p98 = scmp.ne.s32.totalorder %s83, %s97
    %p99 = scmp.eq.s32.totalorder %s26, 0
    %p100 = por %p98, %p99
    %s102 = sadd.s32 %s101, 1
    %p105 = scmp.eq.s32.totalorder %s20, 1
    %p106 = scmp.ne.s32.totalorder %s101, %s103
    %p107 = scmp.eq.s32.totalorder %s20, 0
    %p108 = por %p106, %p107
    %p109 = scmp.ne.s32.totalorder %s101, %s103
    %p110 = scmp.eq.s32.totalorder %s25, 1
    %p111 = por %p109, %p110
    %p112 = scmp.ne.s32.totalorder %s103, %s104
    %p113 = scmp.eq.s32.totalorder %s25, 0
    %p114 = por %p112, %p113
    %p115 = scmp.ne.s32.totalorder %s103, %s104
    %p116 = scmp.eq.s32.totalorder %s26, 1
    %p117 = por %p115, %p116
    %p119 = scmp.ne.s32.totalorder %s104, %s118
    %p120 = scmp.eq.s32.totalorder %s26, 0
    %p121 = por %p119, %p120
    %s123 = sadd.s32 %s122, 1
    %p126 = scmp.eq.s32.totalorder %s20, 1
    %p127 = scmp.ne.s32.totalorder %s122, %s124
    %p128 = scmp.eq.s32.totalorder %s20, 0
    %p129 = por %p127, %p128
    %p130 = scmp.ne.s32.totalorder %s122, %s124
    %p131 = scmp.eq.s32.totalorder %s25, 1
    %p132 = por %p130, %p131
    %p133 = scmp.ne.s32.totalorder %s124, %s125
    %p134 = scmp.eq.s32.totalorder %s25, 0
    %p135 = por %p133, %p134
    %p136 = scmp.ne.s32.totalorder %s124, %s125
    %p137 = scmp.eq.s32.totalorder %s26, 1
    %p138 = por %p136, %p137
    %p140 = scmp.ne.s32.totalorder %s125, %s139
    %p141 = scmp.eq.s32.totalorder %s26, 0
    %p142 = por %p140, %p141
    %s144 = sadd.s32 %s143, 1
    %p147 = scmp.eq.s32.totalorder %s20, 1
    %p148 = scmp.ne.s32.totalorder %s143, %s145
    %p149 = scmp.eq.s32.totalorder %s20, 0
    %p150 = por %p148, %p149
    %p151 = scmp.ne.s32.totalorder %s143, %s145
    %p152 = scmp.eq.s32.totalorder %s25, 1
    %p153 = por %p151, %p152
    %p154 = scmp.ne.s32.totalorder %s145, %s146
    %p155 = scmp.eq.s32.totalorder %s25, 0
    %p156 = por %p154, %p155
    %p157 = scmp.ne.s32.totalorder %s145, %s146
    %p158 = scmp.eq.s32.totalorder %s26, 1
    %p159 = por %p157, %p158
    %p161 = scmp.ne.s32.totalorder %s146, %s160
    %p162 = scmp.eq.s32.totalorder %s26, 0
    %p163 = por %p161, %p162
    %s165 = sadd.s32 %s164, 1
    %p168 = scmp.eq.s32.totalorder %s20, 1
    %p169 = scmp.ne.s32.totalorder %s164, %s166
    %p170 = scmp.eq.s32.totalorder %s20, 0
    %p171 = por %p169, %p170
    %p172 = scmp.ne.s32.totalorder %s164, %s166
    %p173 = scmp.eq.s32.totalorder %s25, 1
    %p174 = por %p172, %p173
    %p175 = scmp.ne.s32.totalorder %s166, %s167
    %p176 = scmp.eq.s32.totalorder %s25, 0
    %p177 = por %p175, %p176
    %p178 = scmp.ne.s32.totalorder %s166, %s167
    %p179 = scmp.eq.s32.totalorder %s26, 1
    %p180 = por %p178, %p179
    %p182 = scmp.ne.s32.totalorder %s167, %s181
    %p183 = scmp.eq.s32.totalorder %s26, 0
    %p184 = por %p182, %p183
    %s186 = sadd.s32 %s185, 1
    %p189 = scmp.eq.s32.totalorder %s20, 1
    %p190 = scmp.ne.s32.totalorder %s185, %s187
    %p191 = scmp.eq.s32.totalorder %s20, 0
    %p192 = por %p190, %p191
    %p193 = scmp.ne.s32.totalorder %s185, %s187
    %p194 = scmp.eq.s32.totalorder %s25, 1
    %p195 = por %p193, %p194
    %p196 = scmp.ne.s32.totalorder %s187, %s188
    %p197 = scmp.eq.s32.totalorder %s25, 0
    %p198 = por %p196, %p197
    %p199 = scmp.ne.s32.totalorder %s187, %s188
    %p200 = scmp.eq.s32.totalorder %s26, 1
    %p201 = por %p199, %p200
    %p203 = scmp.ne.s32.totalorder %s188, %s202
    %p204 = scmp.eq.s32.totalorder %s26, 0
    %p205 = por %p203, %p204
    %s207 = sadd.s32 %s206, 1
    %p210 = scmp.eq.s32.totalorder %s20, 1
    %p211 = scmp.ne.s32.totalorder %s206, %s208
    %p212 = scmp.eq.s32.totalorder %s20, 0
    %p213 = por %p211, %p212
    %p214 = scmp.ne.s32.totalorder %s206, %s208
    %p215 = scmp.eq.s32.totalorder %s25, 1
    %p216 = por %p214, %p215
    %p217 = scmp.ne.s32.totalorder %s208, %s209
    %p218 = scmp.eq.s32.totalorder %s25, 0
    %p219 = por %p217, %p218
    %p220 = scmp.ne.s32.totalorder %s208, %s209
    %p221 = scmp.eq.s32.totalorder %s26, 1
    %p222 = por %p220, %p221
    %p224 = scmp.ne.s32.totalorder %s209, %s223
    %p225 = scmp.eq.s32.totalorder %s26, 0
    %p226 = por %p224, %p225
    %s228 = sadd.s32 %s227, 1
    %p231 = scmp.eq.s32.totalorder %s20, 1
    %p232 = scmp.ne.s32.totalorder %s227, %s229
    %p233 = scmp.eq.s32.totalorder %s20, 0
    %p234 = por %p232, %p233
    %p235 = scmp.ne.s32.totalorder %s227, %s229
    %p236 = scmp.eq.s32.totalorder %s25, 1
    %p237 = por %p235, %p236
    %p238 = scmp.ne.s32.totalorder %s229, %s230
    %p239 = scmp.eq.s32.totalorder %s25, 0
    %p240 = por %p238, %p239
    %p241 = scmp.ne.s32.totalorder %s229, %s230
    %p242 = scmp.eq.s32.totalorder %s26, 1
    %p243 = por %p241, %p242
    %p245 = scmp.ne.s32.totalorder %s230, %s244
    %p246 = scmp.eq.s32.totalorder %s26, 0
    %p247 = por %p245, %p246
    %s249 = sadd.s32 %s248, 1
    %p252 = scmp.eq.s32.totalorder %s20, 1
    %p253 = scmp.ne.s32.totalorder %s248, %s250
    %p254 = scmp.eq.s32.totalorder %s20, 0
    %p255 = por %p253, %p254
    %p256 = scmp.ne.s32.totalorder %s248, %s250
    %p257 = scmp.eq.s32.totalorder %s25, 1
    %p258 = por %p256, %p257
    %p259 = scmp.ne.s32.totalorder %s250, %s251
    %p260 = scmp.eq.s32.totalorder %s25, 0
    %p261 = por %p259, %p260
    %p262 = scmp.ne.s32.totalorder %s250, %s251
    %p263 = scmp.eq.s32.totalorder %s26, 1
    %p264 = por %p262, %p263
    %p266 = scmp.ne.s32.totalorder %s251, %s265
    %p267 = scmp.eq.s32.totalorder %s26, 0
    %p268 = por %p266, %p267
    %s270 = sadd.s32 %s269, 1
    %p273 = scmp.eq.s32.totalorder %s20, 1
    %p274 = scmp.ne.s32.totalorder %s269, %s271
    %p275 = scmp.eq.s32.totalorder %s20, 0
    %p276 = por %p274, %p275
    %p277 = scmp.ne.s32.totalorder %s269, %s271
    %p278 = scmp.eq.s32.totalorder %s25, 1
    %p279 = por %p277, %p278
    %p280 = scmp.ne.s32.totalorder %s271, %s272
    %p281 = scmp.eq.s32.totalorder %s25, 0
    %p282 = por %p280, %p281
    %p283 = scmp.ne.s32.totalorder %s271, %s272
    %p284 = scmp.eq.s32.totalorder %s26, 1
    %p285 = por %p283, %p284
    %p287 = scmp.ne.s32.totalorder %s272, %s286
    %p288 = scmp.eq.s32.totalorder %s26, 0
    %p289 = por %p287, %p288
    %s291 = sadd.s32 %s290, 1
    %p294 = scmp.eq.s32.totalorder %s20, 1
    %p295 = scmp.ne.s32.totalorder %s290, %s292
    %p296 = scmp.eq.s32.totalorder %s20, 0
    %p297 = por %p295, %p296
    %p298 = scmp.ne.s32.totalorder %s290, %s292
    %p299 = scmp.eq.s32.totalorder %s25, 1
    %p300 = por %p298, %p299
    %p301 = scmp.ne.s32.totalorder %s292, %s293
    %p302 = scmp.eq.s32.totalorder %s25, 0
    %p303 = por %p301, %p302
    %p304 = scmp.ne.s32.totalorder %s292, %s293
    %p305 = scmp.eq.s32.totalorder %s26, 1
    %p306 = por %p304, %p305
    %p308 = scmp.ne.s32.totalorder %s293, %s307
    %p309 = scmp.eq.s32.totalorder %s26, 0
    %p310 = por %p308, %p309
    %s312 = sadd.s32 %s311, 1
    %p315 = scmp.eq.s32.totalorder %s20, 1
    %p316 = scmp.ne.s32.totalorder %s311, %s313
    %p317 = scmp.eq.s32.totalorder %s20, 0
    %p318 = por %p316, %p317
    %p319 = scmp.ne.s32.totalorder %s311, %s313
    %p320 = scmp.eq.s32.totalorder %s25, 1
    %p321 = por %p319, %p320
    %p322 = scmp.ne.s32.totalorder %s313, %s314
    %p323 = scmp.eq.s32.totalorder %s25, 0
    %p324 = por %p322, %p323
    %p325 = scmp.ne.s32.totalorder %s313, %s314
    %p326 = scmp.eq.s32.totalorder %s26, 1
    %p327 = por %p325, %p326
    %p329 = scmp.ne.s32.totalorder %s314, %s328
    %p330 = scmp.eq.s32.totalorder %s26, 0
    %p331 = por %p329, %p330
    %s332 = ssub.s32 %s20, %s27
    %p333 = scmp.eq.s32.totalorder %s332, 0
    %s335 = sadd.s32 %s334, 1
    %s336 = scalar_select %p333, %s334, %s335
    %p339 = pneg %p333
    %p340 = scmp.eq.s32.totalorder %s20, 1
    %p341 = por %p339, %p340
    %p342 = scmp.ne.s32.totalorder %s334, %s337
    %p343 = scmp.eq.s32.totalorder %s20, 0
    %p344 = por %p342, %p343
    %p345 = scmp.ne.s32.totalorder %s334, %s337
    %p346 = scmp.eq.s32.totalorder %s25, 1
    %p347 = por %p345, %p346
    %p348 = scmp.ne.s32.totalorder %s337, %s338
    %p349 = scmp.eq.s32.totalorder %s25, 0
    %p350 = por %p348, %p349
    %p351 = scmp.ne.s32.totalorder %s337, %s338
    %p352 = scmp.eq.s32.totalorder %s26, 1
    %p353 = por %p351, %p352
    %p355 = scmp.ne.s32.totalorder %s338, %s354
    %p356 = scmp.eq.s32.totalorder %s26, 0
    %p357 = por %p355, %p356
    %p358 = scmp.le.s32.totalorder 1, %s20
    %p359 = scmp.lt.s32.totalorder %s20, 3
    %p360 = pnand %p358, %p359
    %p361 = pneg %p360
    // Predicated region
    $region9: #{mab_forward.1} parent=5 // pred_check
      _
    $region10: #{mab_forward.1} parent=5 // pred_check_branch
      %363 = sbr.rel (%p360) target = $region12
    $region11: #{mab_forward.1} parent=5 // pred_region
      %s364 = ssub.s32 %s20, 1
      // Predicated region
      $region13: #{mab_forward.1} parent=11 // pred_check
        %p365 = pneg %p93
      $region14: #{mab_forward.1} parent=11 // pred_check_branch
        %367 = sbr.rel (%p365) target = $region16
      $region15: #{mab_forward.1} parent=11 // pred_region
        _
      $region16: #{mab_forward.1} parent=11 // pred_fallthru
        _
      // Predicated region
      $region17: #{mab_forward.1} parent=11 // pred_check
        %p368 = pneg %p114
      $region18: #{mab_forward.1} parent=11 // pred_check_branch
        %370 = sbr.rel (%p368) target = $region20
      $region19: #{mab_forward.1} parent=11 // pred_region
        _
      $region20: #{mab_forward.1} parent=11 // pred_fallthru
        _
      // Predicated region
      $region21: #{mab_forward.1} parent=11 // pred_check
        %p371 = pneg %p135
      $region22: #{mab_forward.1} parent=11 // pred_check_branch
        %373 = sbr.rel (%p371) target = $region24
      $region23: #{mab_forward.1} parent=11 // pred_region
        _
      $region24: #{mab_forward.1} parent=11 // pred_fallthru
        _
      // Predicated region
      $region25: #{mab_forward.1} parent=11 // pred_check
        %p374 = pneg %p156
      $region26: #{mab_forward.1} parent=11 // pred_check_branch
        %376 = sbr.rel (%p374) target = $region28
      $region27: #{mab_forward.1} parent=11 // pred_region
        _
      $region28: #{mab_forward.1} parent=11 // pred_fallthru
        _
      // Predicated region
      $region29: #{mab_forward.1} parent=11 // pred_check
        %p377 = pneg %p177
      $region30: #{mab_forward.1} parent=11 // pred_check_branch
        %379 = sbr.rel (%p377) target = $region32
      $region31: #{mab_forward.1} parent=11 // pred_region
        _
      $region32: #{mab_forward.1} parent=11 // pred_fallthru
        _
      // Predicated region
      $region33: #{mab_forward.1} parent=11 // pred_check
        %p380 = pneg %p198
      $region34: #{mab_forward.1} parent=11 // pred_check_branch
        %382 = sbr.rel (%p380) target = $region36
      $region35: #{mab_forward.1} parent=11 // pred_region
        _
      $region36: #{mab_forward.1} parent=11 // pred_fallthru
        _
      // Predicated region
      $region37: #{mab_forward.1} parent=11 // pred_check
        %p383 = pneg %p219
      $region38: #{mab_forward.1} parent=11 // pred_check_branch
        %385 = sbr.rel (%p383) target = $region40
      $region39: #{mab_forward.1} parent=11 // pred_region
        _
      $region40: #{mab_forward.1} parent=11 // pred_fallthru
        _
      // Predicated region
      $region41: #{mab_forward.1} parent=11 // pred_check
        %p386 = pneg %p240
      $region42: #{mab_forward.1} parent=11 // pred_check_branch
        %388 = sbr.rel (%p386) target = $region44
      $region43: #{mab_forward.1} parent=11 // pred_region
        _
      $region44: #{mab_forward.1} parent=11 // pred_fallthru
        _
      // Predicated region
      $region45: #{mab_forward.1} parent=11 // pred_check
        %p389 = pneg %p261
      $region46: #{mab_forward.1} parent=11 // pred_check_branch
        %391 = sbr.rel (%p389) target = $region48
      $region47: #{mab_forward.1} parent=11 // pred_region
        _
      $region48: #{mab_forward.1} parent=11 // pred_fallthru
        _
      // Predicated region
      $region49: #{mab_forward.1} parent=11 // pred_check
        %p392 = pneg %p282
      $region50: #{mab_forward.1} parent=11 // pred_check_branch
        %394 = sbr.rel (%p392) target = $region52
      $region51: #{mab_forward.1} parent=11 // pred_region
        _
      $region52: #{mab_forward.1} parent=11 // pred_fallthru
        _
      // Predicated region
      $region53: #{mab_forward.1} parent=11 // pred_check
        %p395 = pneg %p303
      $region54: #{mab_forward.1} parent=11 // pred_check_branch
        %397 = sbr.rel (%p395) target = $region56
      $region55: #{mab_forward.1} parent=11 // pred_region
        _
      $region56: #{mab_forward.1} parent=11 // pred_fallthru
        _
      // Predicated region
      $region57: #{mab_forward.1} parent=11 // pred_check
        %p398 = pneg %p324
      $region58: #{mab_forward.1} parent=11 // pred_check_branch
        %400 = sbr.rel (%p398) target = $region60
      $region59: #{mab_forward.1} parent=11 // pred_region
        _
      $region60: #{mab_forward.1} parent=11 // pred_fallthru
        _
    $region12: #{mab_forward.1} parent=5 // pred_fallthru
      _
    %p401 = scmp.lt.s32.totalorder %s20, 2
    // Predicated region
    $region61: #{mab_forward.1} parent=5 // pred_check
      %p402 = pneg %p401
    $region62: #{mab_forward.1} parent=5 // pred_check_branch
      %404 = sbr.rel (%p402) target = $region64
    $region63: #{mab_forward.1} parent=5 // pred_region
      // Predicated region
      $region65: #{mab_forward.1} parent=63 // pred_check
        %p405 = pneg %p40
      $region66: #{mab_forward.1} parent=63 // pred_check_branch
        %407 = sbr.rel (%p405) target = $region68
      $region67: #{mab_forward.1} parent=63 // pred_region
        %p408 = scmp.lt.s32.totalorder %s20, 1
        %s409 = scalar_select %p408, %s20, 1
        %s410 = smul.addr %s409, 8
        %s411 = scalar_lea.vmem %s0, %s410
      $region68: #{mab_forward.1} parent=63 // pred_fallthru
        _
      // Predicated region
      $region69: #{mab_forward.1} parent=63 // pred_check
        %p412 = pneg %p66
      $region70: #{mab_forward.1} parent=63 // pred_check_branch
        %414 = sbr.rel (%p412) target = $region72
      $region71: #{mab_forward.1} parent=63 // pred_region
        %p415 = scmp.lt.s32.totalorder %s20, 1
        %s416 = scalar_select %p415, %s20, 1
        %s417 = smul.addr %s416, 8
        %s418 = scalar_lea.vmem %s1, %s417
      $region72: #{mab_forward.1} parent=63 // pred_fallthru
        _
    $region64: #{mab_forward.1} parent=5 // pred_fallthru
      _
    %p419 = scmp.le.s32.totalorder 1, %s20
    %p420 = scmp.lt.s32.totalorder %s20, 3
    %p421 = pnand %p419, %p420
    %p422 = pneg %p421
    // Predicated region
    $region73: #{mab_forward.1} parent=5 // pred_check
      _
    $region74: #{mab_forward.1} parent=5 // pred_check_branch
      %424 = sbr.rel (%p421) target = $region76
    $region75: #{mab_forward.1} parent=5 // pred_region
      %s425 = ssub.s32 %s20, 1
      %p426 = scmp.lt.s32.totalorder %s25, 1
      %s427 = scalar_select %p426, %s25, 1
      %s428 = smul.addr %s427, 8
      %s429 = scalar_lea.vmem %s0, %s428
      %p430 = pneg %p46
      %p431 = pneg %p43
      %p432 = scmp.lt.s32.totalorder %s25, 1
      %s433 = scalar_select %p432, %s25, 1
      %s434 = smul.addr %s433, 8
      %s435 = scalar_lea.vmem %s1, %s434
      %p436 = pneg %p72
      %p437 = pneg %p69
      %p438 = pneg %p93
      %p439 = pneg %p90
      %p440 = pneg %p114
      %p441 = pneg %p111
      %p442 = pneg %p135
      %p443 = pneg %p132
      %p444 = pneg %p156
      %p445 = pneg %p153
      %p446 = pneg %p177
      %p447 = pneg %p174
      %p448 = pneg %p198
      %p449 = pneg %p195
      %p450 = pneg %p219
      %p451 = pneg %p216
      %p452 = pneg %p240
      %p453 = pneg %p237
      %p454 = pneg %p261
      %p455 = pneg %p258
      %p456 = pneg %p282
      %p457 = pneg %p279
      %p458 = pneg %p303
      %p459 = pneg %p300
      %p460 = pneg %p324
      %p461 = pneg %p321
      %p462 = pneg %p350
      %p463 = pneg %p347
      %p464 = scmp.lt.s32.totalorder %s25, 1
      %s465 = scalar_select %p464, %s25, 1
      %s466 = smul.addr %s465, 8
      %s467 = scalar_lea.vmem %s14, %s466
      %p468 = scmp.lt.s32.totalorder %s25, 1
      %s469 = scalar_select %p468, %s25, 1
      %s470 = smul.addr %s469, 8
      %s471 = scalar_lea.vmem %s0, %s470
      %p472 = scmp.lt.s32.totalorder %s25, 1
      %s473 = scalar_select %p472, %s25, 1
      %s474 = smul.addr %s473, 8
      %s475 = scalar_lea.vmem %s1, %s474
      %p476 = scmp.lt.s32.totalorder %s25, 1
      %s477 = scalar_select %p476, %s25, 1
      %s478 = smul.addr %s477, 8
      %s479 = scalar_lea.vmem %s14, %s478
      %v480 = vld [vmem:[%s471] sm:$0xff]
      %v481 = vld [vmem:[%s475] sm:$0xff]
      loop: start=0, step=1, limit=8
      $region77: #{mab_forward.1} parent=75 // loop_pre_header
        _
      $region78: #{mab_forward.1} parent=75 // loop_header
        %s483 = sphi 0, %s487
        %p484 = scmp.ge.s32.totalorder %s483, 8
        %v488 = vphi 0.0, %v988
      $region79: #{mab_forward.1} parent=75 // loop_header_branch
        %486 = sbr.rel (%p484) target = $region83
      $region80: #{mab_forward.1} parent=75 // loop_body
        %s489 = smul.u32 %s483, 32
        %s490 = scalar_lea.vmem %s2, %s489
        %v491 = vld [vmem:[%s490] sm:$0xff]
        %v492 = vld [vmem:[%s490 + $0x8] sm:$0xff]
        %v493 = vld [vmem:[%s490 + $0x10] sm:$0xff]
        %v494 = vld [vmem:[%s490 + $0x18] sm:$0xff]
        %s495 = scalar_lea.vmem %s5, %s483
        %v496 = vld [vmem:[%s495] sm:$0x1]
        %v498 = vlaneseq
        %v499 = vshrl.u32 %v498, 7
        %v500 = vsub.s32 0, %v499
        %v501 = vrot.slane %v496, %v500
        %vm503 = vcmask 261120
        %v505 = vsel %vm503, %v480, 0
        %507 = vmatprep.subr.mxu0 0.0
        %508 = vmatpush1.msra.mxu0 0.0
        %509 = vmatprep.subr.mxu0 0.0
        %510 = vmatpush1.msra.mxu0 0.0
        %511 = vmatprep.subr.mxu0 0.0
        %512 = vmatpush1.msra.mxu0 0.0
        %513 = vmatprep.subr.mxu0 0.0
        %514 = vmatpush1.msra.mxu0 0.0
        %515 = vmatprep.subr.mxu0 0.0
        %516 = vmatpush1.msra.mxu0 0.0
        %517 = vmatprep.subr.mxu0 0.0
        %518 = vmatpush1.msra.mxu0 0.0
        %519 = vmatprep.subr.mxu0 0.0
        %520 = vmatpush1.msra.mxu0 0.0
        %521 = vmatprep.subr.mxu0 0.0
        %522 = vmatpush1.msra.mxu0 0.0
        %523 = vmatprep.subr.mxu0 0.0
        %524 = vmatpush1.msra.mxu0 0.0
        %525 = vmatprep.subr.mxu0 0.0
        %526 = vmatpush1.msra.mxu0 0.0
        %527 = vmatprep.subr.mxu0 0.0
        %528 = vmatpush1.msra.mxu0 0.0
        %529 = vmatprep.subr.mxu0 0.0
        %530 = vmatpush1.msra.mxu0 0.0
        %531 = vmatprep.subr.mxu0 0.0
        %532 = vmatpush1.msra.mxu0 %v494
        %533 = vmatprep.subr.mxu0 0.0
        %534 = vmatpush1.msra.mxu0 %v493
        %535 = vmatprep.subr.mxu0 0.0
        %536 = vmatpush1.msra.mxu0 %v492
        %537 = vmatprep.subr.mxu0 0.0
        %538 = vmatpush1.msra.mxu0 %v491
        %539 = vmatprep.subr.mxu0 0.0
        %540 = vmatpush2.msra.mxu0 0.0
        %541 = vmatprep.subr.mxu0 0.0
        %542 = vmatpush2.msra.mxu0 0.0
        %543 = vmatprep.subr.mxu0 0.0
        %544 = vmatpush2.msra.mxu0 0.0
        %545 = vmatprep.subr.mxu0 0.0
        %546 = vmatpush2.msra.mxu0 0.0
        %547 = vmatprep.subr.mxu0 0.0
        %548 = vmatpush2.msra.mxu0 0.0
        %549 = vmatprep.subr.mxu0 0.0
        %550 = vmatpush2.msra.mxu0 0.0
        %551 = vmatprep.subr.mxu0 0.0
        %552 = vmatpush2.msra.mxu0 0.0
        %553 = vmatprep.subr.mxu0 0.0
        %554 = vmatpush2.msra.mxu0 0.0
        %555 = vmatprep.subr.mxu0 0.0
        %556 = vmatpush2.msra.mxu0 0.0
        %557 = vmatprep.subr.mxu0 0.0
        %558 = vmatpush2.msra.mxu0 0.0
        %559 = vmatprep.subr.mxu0 0.0
        %560 = vmatpush2.msra.mxu0 0.0
        %561 = vmatprep.subr.mxu0 0.0
        %562 = vmatpush2.msra.mxu0 0.0
        %563 = vmatprep.subr.mxu0 0.0
        %564 = vmatpush2.msra.mxu0 0.0
        %565 = vmatprep.subr.mxu0 0.0
        %566 = vmatpush2.msra.mxu0 0.0
        %567 = vmatprep.subr.mxu0 0.0
        %568 = vmatpush2.msra.mxu0 0.0
        %569 = vmatprep.subr.mxu0 0.0
        %570 = vmatpush2.msra.mxu0 0.0
        %571 = vmatprep.mubr.f32.mxu0 0.0
        %572 = vmatmul.mubr.f32.gmra.mxu0 %v505
        %v573 = vpop.f32.mrf.mxu0
        %v574 = vadd.f32 %v501, %v573
        %v575 = vpop.f32.mrf.mxu0
        %576 = vdwg.mxu0
        %s577 = scalar_lea.vmem %s3, %s489
        %v578 = vld [vmem:[%s577] sm:$0xff]
        %v579 = vld [vmem:[%s577 + $0x8] sm:$0xff]
        %v580 = vld [vmem:[%s577 + $0x10] sm:$0xff]
        %v581 = vld [vmem:[%s577 + $0x18] sm:$0xff]
        %s582 = scalar_lea.vmem %s6, %s483
        %v583 = vld [vmem:[%s582] sm:$0x1]
        %v585 = vlaneseq
        %v586 = vshrl.u32 %v585, 7
        %v587 = vsub.s32 0, %v586
        %v588 = vrot.slane %v583, %v587
        %v591 = vsel %vm503, %v481, 0
        %593 = vmatprep.subr.mxu0 0.0
        %594 = vmatpush1.msra.mxu0 0.0
        %595 = vmatprep.subr.mxu0 0.0
        %596 = vmatpush1.msra.mxu0 0.0
        %597 = vmatprep.subr.mxu0 0.0
        %598 = vmatpush1.msra.mxu0 0.0
        %599 = vmatprep.subr.mxu0 0.0
        %600 = vmatpush1.msra.mxu0 0.0
        %601 = vmatprep.subr.mxu0 0.0
        %602 = vmatpush1.msra.mxu0 0.0
        %603 = vmatprep.subr.mxu0 0.0
        %604 = vmatpush1.msra.mxu0 0.0
        %605 = vmatprep.subr.mxu0 0.0
        %606 = vmatpush1.msra.mxu0 0.0
        %607 = vmatprep.subr.mxu0 0.0
        %608 = vmatpush1.msra.mxu0 0.0
        %609 = vmatprep.subr.mxu0 0.0
        %610 = vmatpush1.msra.mxu0 0.0
        %611 = vmatprep.subr.mxu0 0.0
        %612 = vmatpush1.msra.mxu0 0.0
        %613 = vmatprep.subr.mxu0 0.0
        %614 = vmatpush1.msra.mxu0 0.0
        %615 = vmatprep.subr.mxu0 0.0
        %616 = vmatpush1.msra.mxu0 0.0
        %617 = vmatprep.subr.mxu0 0.0
        %618 = vmatpush1.msra.mxu0 %v581
        %619 = vmatprep.subr.mxu0 0.0
        %620 = vmatpush1.msra.mxu0 %v580
        %621 = vmatprep.subr.mxu0 0.0
        %622 = vmatpush1.msra.mxu0 %v579
        %623 = vmatprep.subr.mxu0 0.0
        %624 = vmatpush1.msra.mxu0 %v578
        %625 = vmatprep.subr.mxu0 0.0
        %626 = vmatpush2.msra.mxu0 0.0
        %627 = vmatprep.subr.mxu0 0.0
        %628 = vmatpush2.msra.mxu0 0.0
        %629 = vmatprep.subr.mxu0 0.0
        %630 = vmatpush2.msra.mxu0 0.0
        %631 = vmatprep.subr.mxu0 0.0
        %632 = vmatpush2.msra.mxu0 0.0
        %633 = vmatprep.subr.mxu0 0.0
        %634 = vmatpush2.msra.mxu0 0.0
        %635 = vmatprep.subr.mxu0 0.0
        %636 = vmatpush2.msra.mxu0 0.0
        %637 = vmatprep.subr.mxu0 0.0
        %638 = vmatpush2.msra.mxu0 0.0
        %639 = vmatprep.subr.mxu0 0.0
        %640 = vmatpush2.msra.mxu0 0.0
        %641 = vmatprep.subr.mxu0 0.0
        %642 = vmatpush2.msra.mxu0 0.0
        %643 = vmatprep.subr.mxu0 0.0
        %644 = vmatpush2.msra.mxu0 0.0
        %645 = vmatprep.subr.mxu0 0.0
        %646 = vmatpush2.msra.mxu0 0.0
        %647 = vmatprep.subr.mxu0 0.0
        %648 = vmatpush2.msra.mxu0 0.0
        %649 = vmatprep.subr.mxu0 0.0
        %650 = vmatpush2.msra.mxu0 0.0
        %651 = vmatprep.subr.mxu0 0.0
        %652 = vmatpush2.msra.mxu0 0.0
        %653 = vmatprep.subr.mxu0 0.0
        %654 = vmatpush2.msra.mxu0 0.0
        %655 = vmatprep.subr.mxu0 0.0
        %656 = vmatpush2.msra.mxu0 0.0
        %657 = vmatprep.mubr.f32.mxu0 0.0
        %658 = vmatmul.mubr.f32.gmra.mxu0 %v591
        %v659 = vpop.f32.mrf.mxu0
        %v660 = vadd.f32 %v588, %v659
        %v661 = vpop.f32.mrf.mxu0
        %662 = vdwg.mxu0
        %s663 = scalar_lea.vmem %s4, %s489
        %v664 = vld [vmem:[%s663] sm:$0xff]
        %v665 = vld [vmem:[%s663 + $0x8] sm:$0xff]
        %v666 = vld [vmem:[%s663 + $0x10] sm:$0xff]
        %v667 = vld [vmem:[%s663 + $0x18] sm:$0xff]
        %s668 = scalar_lea.vmem %s7, %s483
        %v669 = vld [vmem:[%s668] sm:$0x1]
        %v671 = vlaneseq
        %v672 = vshrl.u32 %v671, 7
        %v673 = vsub.s32 0, %v672
        %v674 = vrot.slane %v669, %v673
        %676 = vmatprep.subr.mxu0 0.0
        %677 = vmatpush1.msra.mxu0 0.0
        %678 = vmatprep.subr.mxu0 0.0
        %679 = vmatpush1.msra.mxu0 0.0
        %680 = vmatprep.subr.mxu0 0.0
        %681 = vmatpush1.msra.mxu0 0.0
        %682 = vmatprep.subr.mxu0 0.0
        %683 = vmatpush1.msra.mxu0 0.0
        %684 = vmatprep.subr.mxu0 0.0
        %685 = vmatpush1.msra.mxu0 0.0
        %686 = vmatprep.subr.mxu0 0.0
        %687 = vmatpush1.msra.mxu0 0.0
        %688 = vmatprep.subr.mxu0 0.0
        %689 = vmatpush1.msra.mxu0 0.0
        %690 = vmatprep.subr.mxu0 0.0
        %691 = vmatpush1.msra.mxu0 0.0
        %692 = vmatprep.subr.mxu0 0.0
        %693 = vmatpush1.msra.mxu0 0.0
        %694 = vmatprep.subr.mxu0 0.0
        %695 = vmatpush1.msra.mxu0 0.0
        %696 = vmatprep.subr.mxu0 0.0
        %697 = vmatpush1.msra.mxu0 0.0
        %698 = vmatprep.subr.mxu0 0.0
        %699 = vmatpush1.msra.mxu0 0.0
        %700 = vmatprep.subr.mxu0 0.0
        %701 = vmatpush1.msra.mxu0 %v667
        %702 = vmatprep.subr.mxu0 0.0
        %703 = vmatpush1.msra.mxu0 %v666
        %704 = vmatprep.subr.mxu0 0.0
        %705 = vmatpush1.msra.mxu0 %v665
        %706 = vmatprep.subr.mxu0 0.0
        %707 = vmatpush1.msra.mxu0 %v664
        %708 = vmatprep.subr.mxu0 0.0
        %709 = vmatpush2.msra.mxu0 0.0
        %710 = vmatprep.subr.mxu0 0.0
        %711 = vmatpush2.msra.mxu0 0.0
        %712 = vmatprep.subr.mxu0 0.0
        %713 = vmatpush2.msra.mxu0 0.0
        %714 = vmatprep.subr.mxu0 0.0
        %715 = vmatpush2.msra.mxu0 0.0
        %716 = vmatprep.subr.mxu0 0.0
        %717 = vmatpush2.msra.mxu0 0.0
        %718 = vmatprep.subr.mxu0 0.0
        %719 = vmatpush2.msra.mxu0 0.0
        %720 = vmatprep.subr.mxu0 0.0
        %721 = vmatpush2.msra.mxu0 0.0
        %722 = vmatprep.subr.mxu0 0.0
        %723 = vmatpush2.msra.mxu0 0.0
        %724 = vmatprep.subr.mxu0 0.0
        %725 = vmatpush2.msra.mxu0 0.0
        %726 = vmatprep.subr.mxu0 0.0
        %727 = vmatpush2.msra.mxu0 0.0
        %728 = vmatprep.subr.mxu0 0.0
        %729 = vmatpush2.msra.mxu0 0.0
        %730 = vmatprep.subr.mxu0 0.0
        %731 = vmatpush2.msra.mxu0 0.0
        %732 = vmatprep.subr.mxu0 0.0
        %733 = vmatpush2.msra.mxu0 0.0
        %734 = vmatprep.subr.mxu0 0.0
        %735 = vmatpush2.msra.mxu0 0.0
        %736 = vmatprep.subr.mxu0 0.0
        %737 = vmatpush2.msra.mxu0 0.0
        %738 = vmatprep.subr.mxu0 0.0
        %739 = vmatpush2.msra.mxu0 0.0
        %740 = vmatprep.mubr.f32.mxu0 0.0
        %741 = vmatmul.mubr.f32.gmra.mxu0 %v591
        %v742 = vpop.f32.mrf.mxu0
        %v743 = vadd.f32 %v674, %v742
        %v744 = vpop.f32.mrf.mxu0
        %745 = vdwg.mxu0
        %vm746 = vcmask 31744
        %v748 = vsel %vm746, %v574, 0
        %v751 = vsel %vm746, %v660, 0
        %753 = vmatprep.subr.mxu0 0.0
        %754 = vmatpush1.xpose.msra.mxu0 0.0
        %755 = vmatprep.subr.mxu0 0.0
        %756 = vmatpush1.xpose.msra.mxu0 0.0
        %757 = vmatprep.subr.mxu0 0.0
        %758 = vmatpush1.xpose.msra.mxu0 0.0
        %759 = vmatprep.subr.mxu0 0.0
        %760 = vmatpush1.xpose.msra.mxu0 0.0
        %761 = vmatprep.subr.mxu0 0.0
        %762 = vmatpush1.xpose.msra.mxu0 0.0
        %763 = vmatprep.subr.mxu0 0.0
        %764 = vmatpush1.xpose.msra.mxu0 0.0
        %765 = vmatprep.subr.mxu0 0.0
        %766 = vmatpush1.xpose.msra.mxu0 0.0
        %767 = vmatprep.subr.mxu0 0.0
        %768 = vmatpush1.xpose.msra.mxu0 0.0
        %769 = vmatprep.subr.mxu0 0.0
        %770 = vmatpush1.xpose.msra.mxu0 0.0
        %771 = vmatprep.subr.mxu0 0.0
        %772 = vmatpush1.xpose.msra.mxu0 0.0
        %773 = vmatprep.subr.mxu0 0.0
        %774 = vmatpush1.xpose.msra.mxu0 0.0
        %775 = vmatprep.subr.mxu0 0.0
        %776 = vmatpush1.xpose.msra.mxu0 0.0
        %777 = vmatprep.subr.mxu0 0.0
        %778 = vmatpush1.xpose.msra.mxu0 0.0
        %779 = vmatprep.subr.mxu0 0.0
        %780 = vmatpush1.xpose.msra.mxu0 0.0
        %781 = vmatprep.subr.mxu0 0.0
        %782 = vmatpush1.xpose.msra.mxu0 0.0
        %783 = vmatprep.subr.mxu0 0.0
        %784 = vmatpush1.xpose.msra.mxu0 %v751
        %785 = vmatprep.subr.mxu0 0.0
        %786 = vmatpush2.xpose.msra.mxu0 0.0
        %787 = vmatprep.subr.mxu0 0.0
        %788 = vmatpush2.xpose.msra.mxu0 0.0
        %789 = vmatprep.subr.mxu0 0.0
        %790 = vmatpush2.xpose.msra.mxu0 0.0
        %791 = vmatprep.subr.mxu0 0.0
        %792 = vmatpush2.xpose.msra.mxu0 0.0
        %793 = vmatprep.subr.mxu0 0.0
        %794 = vmatpush2.xpose.msra.mxu0 0.0
        %795 = vmatprep.subr.mxu0 0.0
        %796 = vmatpush2.xpose.msra.mxu0 0.0
        %797 = vmatprep.subr.mxu0 0.0
        %798 = vmatpush2.xpose.msra.mxu0 0.0
        %799 = vmatprep.subr.mxu0 0.0
        %800 = vmatpush2.xpose.msra.mxu0 0.0
        %801 = vmatprep.subr.mxu0 0.0
        %802 = vmatpush2.xpose.msra.mxu0 0.0
        %803 = vmatprep.subr.mxu0 0.0
        %804 = vmatpush2.xpose.msra.mxu0 0.0
        %805 = vmatprep.subr.mxu0 0.0
        %806 = vmatpush2.xpose.msra.mxu0 0.0
        %807 = vmatprep.subr.mxu0 0.0
        %808 = vmatpush2.xpose.msra.mxu0 0.0
        %809 = vmatprep.subr.mxu0 0.0
        %810 = vmatpush2.xpose.msra.mxu0 0.0
        %811 = vmatprep.subr.mxu0 0.0
        %812 = vmatpush2.xpose.msra.mxu0 0.0
        %813 = vmatprep.subr.mxu0 0.0
        %814 = vmatpush2.xpose.msra.mxu0 0.0
        %815 = vmatprep.subr.mxu0 0.0
        %816 = vmatpush2.xpose.msra.mxu0 0.0
        %817 = vmatprep.mubr.f32.mxu0 0.0
        %818 = vmatmul.mubr.f32.gmra.mxu0 %v748
        %v819 = vpop.f32.mrf.mxu0
        %v820 = vadd.f32 0.0, %v819
        %v821 = vpop.f32.mrf.mxu0
        %822 = vdwg.mxu0
        %vm823 = vcmask 64512
        %v824 = vsel %vm823, %v820, -inf
        %825 = vmax.xlane.f32.xlu0 %v824
        %v826 = vpop.xlane.xlu0 %825
        %v827 = vsub.f32 %v820, %v826
        %v828 = vmul.f32 %v827, 1.442695
        %v829 = vpow.pop %v828
        %v830 = vsel %vm823, %v829, 0.0
        %831 = vadd.xlane.f32.xlu0 %v830
        %v832 = vpop.xlane.xlu0 %831
        %v833 = vrcp.pop %v832
        %v834 = vmul.f32 %v829, %v833
        %v836 = vsel %vm823, %v834, 0
        %838 = vmatprep.subr.mxu0 0.0
        %839 = vmatpush1.msra.mxu0 0.0
        %840 = vmatprep.subr.mxu0 0.0
        %841 = vmatpush1.msra.mxu0 0.0
        %842 = vmatprep.subr.mxu0 0.0
        %843 = vmatpush1.msra.mxu0 0.0
        %844 = vmatprep.subr.mxu0 0.0
        %845 = vmatpush1.msra.mxu0 0.0
        %846 = vmatprep.subr.mxu0 0.0
        %847 = vmatpush1.msra.mxu0 0.0
        %848 = vmatprep.subr.mxu0 0.0
        %849 = vmatpush1.msra.mxu0 0.0
        %850 = vmatprep.subr.mxu0 0.0
        %851 = vmatpush1.msra.mxu0 0.0
        %852 = vmatprep.subr.mxu0 0.0
        %853 = vmatpush1.msra.mxu0 0.0
        %854 = vmatprep.subr.mxu0 0.0
        %855 = vmatpush1.msra.mxu0 0.0
        %856 = vmatprep.subr.mxu0 0.0
        %857 = vmatpush1.msra.mxu0 0.0
        %858 = vmatprep.subr.mxu0 0.0
        %859 = vmatpush1.msra.mxu0 0.0
        %860 = vmatprep.subr.mxu0 0.0
        %861 = vmatpush1.msra.mxu0 0.0
        %862 = vmatprep.subr.mxu0 0.0
        %863 = vmatpush1.msra.mxu0 0.0
        %864 = vmatprep.subr.mxu0 0.0
        %865 = vmatpush1.msra.mxu0 0.0
        %866 = vmatprep.subr.mxu0 0.0
        %867 = vmatpush1.msra.mxu0 0.0
        %868 = vmatprep.subr.mxu0 0.0
        %869 = vmatpush1.msra.mxu0 %v743
        %870 = vmatprep.subr.mxu0 0.0
        %871 = vmatpush2.msra.mxu0 0.0
        %872 = vmatprep.subr.mxu0 0.0
        %873 = vmatpush2.msra.mxu0 0.0
        %874 = vmatprep.subr.mxu0 0.0
        %875 = vmatpush2.msra.mxu0 0.0
        %876 = vmatprep.subr.mxu0 0.0
        %877 = vmatpush2.msra.mxu0 0.0
        %878 = vmatprep.subr.mxu0 0.0
        %879 = vmatpush2.msra.mxu0 0.0
        %880 = vmatprep.subr.mxu0 0.0
        %881 = vmatpush2.msra.mxu0 0.0
        %882 = vmatprep.subr.mxu0 0.0
        %883 = vmatpush2.msra.mxu0 0.0
        %884 = vmatprep.subr.mxu0 0.0
        %885 = vmatpush2.msra.mxu0 0.0
        %886 = vmatprep.subr.mxu0 0.0
        %887 = vmatpush2.msra.mxu0 0.0
        %888 = vmatprep.subr.mxu0 0.0
        %889 = vmatpush2.msra.mxu0 0.0
        %890 = vmatprep.subr.mxu0 0.0
        %891 = vmatpush2.msra.mxu0 0.0
        %892 = vmatprep.subr.mxu0 0.0
        %893 = vmatpush2.msra.mxu0 0.0
        %894 = vmatprep.subr.mxu0 0.0
        %895 = vmatpush2.msra.mxu0 0.0
        %896 = vmatprep.subr.mxu0 0.0
        %897 = vmatpush2.msra.mxu0 0.0
        %898 = vmatprep.subr.mxu0 0.0
        %899 = vmatpush2.msra.mxu0 0.0
        %900 = vmatprep.subr.mxu0 0.0
        %901 = vmatpush2.msra.mxu0 0.0
        %902 = vmatprep.mubr.f32.mxu0 0.0
        %903 = vmatmul.mubr.f32.gmra.mxu0 %v836
        %v904 = vpop.f32.mrf.mxu0
        %v905 = vadd.f32 0.0, %v904
        %v906 = vpop.f32.mrf.mxu0
        %907 = vdwg.mxu0
        %s908 = smul.u32 %s483, 4
        %s909 = scalar_lea.vmem %s8, %s908
        %v910 = vld [vmem:[%s909] sm:$0xf]
        %v912 = vsel %vm746, %v905, 0
        %vm914 = vcmask 1043456
        %v916 = vsel %vm914, %v910, 0
        %918 = vmatprep.subr.mxu0 0.0
        %919 = vmatpush1.msra.mxu0 0.0
        %920 = vmatprep.subr.mxu0 0.0
        %921 = vmatpush1.msra.mxu0 0.0
        %922 = vmatprep.subr.mxu0 0.0
        %923 = vmatpush1.msra.mxu0 0.0
        %924 = vmatprep.subr.mxu0 0.0
        %925 = vmatpush1.msra.mxu0 0.0
        %926 = vmatprep.subr.mxu0 0.0
        %927 = vmatpush1.msra.mxu0 0.0
        %928 = vmatprep.subr.mxu0 0.0
        %929 = vmatpush1.msra.mxu0 0.0
        %930 = vmatprep.subr.mxu0 0.0
        %931 = vmatpush1.msra.mxu0 0.0
        %932 = vmatprep.subr.mxu0 0.0
        %933 = vmatpush1.msra.mxu0 0.0
        %934 = vmatprep.subr.mxu0 0.0
        %935 = vmatpush1.msra.mxu0 0.0
        %936 = vmatprep.subr.mxu0 0.0
        %937 = vmatpush1.msra.mxu0 0.0
        %938 = vmatprep.subr.mxu0 0.0
        %939 = vmatpush1.msra.mxu0 0.0
        %940 = vmatprep.subr.mxu0 0.0
        %941 = vmatpush1.msra.mxu0 0.0
        %942 = vmatprep.subr.mxu0 0.0
        %943 = vmatpush1.msra.mxu0 0.0
        %944 = vmatprep.subr.mxu0 0.0
        %945 = vmatpush1.msra.mxu0 0.0
        %946 = vmatprep.subr.mxu0 0.0
        %947 = vmatpush1.msra.mxu0 0.0
        %948 = vmatprep.subr.mxu0 0.0
        %949 = vmatpush1.msra.mxu0 %v916
        %950 = vmatprep.subr.mxu0 0.0
        %951 = vmatpush2.msra.mxu0 0.0
        %952 = vmatprep.subr.mxu0 0.0
        %953 = vmatpush2.msra.mxu0 0.0
        %954 = vmatprep.subr.mxu0 0.0
        %955 = vmatpush2.msra.mxu0 0.0
        %956 = vmatprep.subr.mxu0 0.0
        %957 = vmatpush2.msra.mxu0 0.0
        %958 = vmatprep.subr.mxu0 0.0
        %959 = vmatpush2.msra.mxu0 0.0
        %960 = vmatprep.subr.mxu0 0.0
        %961 = vmatpush2.msra.mxu0 0.0
        %962 = vmatprep.subr.mxu0 0.0
        %963 = vmatpush2.msra.mxu0 0.0
        %964 = vmatprep.subr.mxu0 0.0
        %965 = vmatpush2.msra.mxu0 0.0
        %966 = vmatprep.subr.mxu0 0.0
        %967 = vmatpush2.msra.mxu0 0.0
        %968 = vmatprep.subr.mxu0 0.0
        %969 = vmatpush2.msra.mxu0 0.0
        %970 = vmatprep.subr.mxu0 0.0
        %971 = vmatpush2.msra.mxu0 0.0
        %972 = vmatprep.subr.mxu0 0.0
        %973 = vmatpush2.msra.mxu0 0.0
        %974 = vmatprep.subr.mxu0 0.0
        %975 = vmatpush2.msra.mxu0 0.0
        %976 = vmatprep.subr.mxu0 0.0
        %977 = vmatpush2.msra.mxu0 0.0
        %978 = vmatprep.subr.mxu0 0.0
        %979 = vmatpush2.msra.mxu0 0.0
        %980 = vmatprep.subr.mxu0 0.0
        %981 = vmatpush2.msra.mxu0 0.0
        %982 = vmatprep.mubr.f32.mxu0 0.0
        %983 = vmatmul.mubr.f32.gmra.mxu0 %v912
        %v984 = vpop.f32.mrf.mxu0
        %v985 = vadd.f32 0.0, %v984
        %v986 = vpop.f32.mrf.mxu0
        %987 = vdwg.mxu0
        %v988 = vadd.f32 %v488, %v985
      $region81: #{mab_forward.1} parent=75 // loop_footer
        %s487 = sadd.s32 1, %s483
      $region82: #{mab_forward.1} parent=75 // loop_footer_branch
        %482 = sbr.rel target = $region78
      $region83: #{mab_forward.1} parent=75 // loop_exit
        _
      %v989 = vld [vmem:[%s9] sm:$0x1]
      %v991 = vlaneseq
      %v992 = vshrl.u32 %v991, 7
      %v993 = vsub.s32 0, %v992
      %v994 = vrot.slane %v989, %v993
      %v996 = vadd.f32 %v488, %v994
      %v997 = vadd.f32 %v996, %v480
      %v998 = vld [vmem:[%s10] sm:$0xff]
      %v999 = vld [vmem:[%s10 + $0x8] sm:$0xff]
      %v1000 = vld [vmem:[%s10 + $0x10] sm:$0xff]
      %v1001 = vld [vmem:[%s10 + $0x18] sm:$0xff]
      %v1002 = vld [vmem:[%s11] sm:$0x1]
      %v1004 = vlaneseq
      %v1005 = vshrl.u32 %v1004, 7
      %v1006 = vsub.s32 0, %v1005
      %v1007 = vrot.slane %v1002, %v1006
      %vm1009 = vcmask 261120
      %v1011 = vsel %vm1009, %v997, 0
      %1013 = vmatprep.subr.mxu0 0.0
      %1014 = vmatpush1.msra.mxu0 0.0
      %1015 = vmatprep.subr.mxu0 0.0
      %1016 = vmatpush1.msra.mxu0 0.0
      %1017 = vmatprep.subr.mxu0 0.0
      %1018 = vmatpush1.msra.mxu0 0.0
      %1019 = vmatprep.subr.mxu0 0.0
      %1020 = vmatpush1.msra.mxu0 0.0
      %1021 = vmatprep.subr.mxu0 0.0
      %1022 = vmatpush1.msra.mxu0 0.0
      %1023 = vmatprep.subr.mxu0 0.0
      %1024 = vmatpush1.msra.mxu0 0.0
      %1025 = vmatprep.subr.mxu0 0.0
      %1026 = vmatpush1.msra.mxu0 0.0
      %1027 = vmatprep.subr.mxu0 0.0
      %1028 = vmatpush1.msra.mxu0 0.0
      %1029 = vmatprep.subr.mxu0 0.0
      %1030 = vmatpush1.msra.mxu0 0.0
      %1031 = vmatprep.subr.mxu0 0.0
      %1032 = vmatpush1.msra.mxu0 0.0
      %1033 = vmatprep.subr.mxu0 0.0
      %1034 = vmatpush1.msra.mxu0 0.0
      %1035 = vmatprep.subr.mxu0 0.0
      %1036 = vmatpush1.msra.mxu0 0.0
      %1037 = vmatprep.subr.mxu0 0.0
      %1038 = vmatpush1.msra.mxu0 %v1001
      %1039 = vmatprep.subr.mxu0 0.0
      %1040 = vmatpush1.msra.mxu0 %v1000
      %1041 = vmatprep.subr.mxu0 0.0
      %1042 = vmatpush1.msra.mxu0 %v999
      %1043 = vmatprep.subr.mxu0 0.0
      %1044 = vmatpush1.msra.mxu0 %v998
      %1045 = vmatprep.subr.mxu0 0.0
      %1046 = vmatpush2.msra.mxu0 0.0
      %1047 = vmatprep.subr.mxu0 0.0
      %1048 = vmatpush2.msra.mxu0 0.0
      %1049 = vmatprep.subr.mxu0 0.0
      %1050 = vmatpush2.msra.mxu0 0.0
      %1051 = vmatprep.subr.mxu0 0.0
      %1052 = vmatpush2.msra.mxu0 0.0
      %1053 = vmatprep.subr.mxu0 0.0
      %1054 = vmatpush2.msra.mxu0 0.0
      %1055 = vmatprep.subr.mxu0 0.0
      %1056 = vmatpush2.msra.mxu0 0.0
      %1057 = vmatprep.subr.mxu0 0.0
      %1058 = vmatpush2.msra.mxu0 0.0
      %1059 = vmatprep.subr.mxu0 0.0
      %1060 = vmatpush2.msra.mxu0 0.0
      %1061 = vmatprep.subr.mxu0 0.0
      %1062 = vmatpush2.msra.mxu0 0.0
      %1063 = vmatprep.subr.mxu0 0.0
      %1064 = vmatpush2.msra.mxu0 0.0
      %1065 = vmatprep.subr.mxu0 0.0
      %1066 = vmatpush2.msra.mxu0 0.0
      %1067 = vmatprep.subr.mxu0 0.0
      %1068 = vmatpush2.msra.mxu0 0.0
      %1069 = vmatprep.subr.mxu0 0.0
      %1070 = vmatpush2.msra.mxu0 0.0
      %1071 = vmatprep.subr.mxu0 0.0
      %1072 = vmatpush2.msra.mxu0 0.0
      %1073 = vmatprep.subr.mxu0 0.0
      %1074 = vmatpush2.msra.mxu0 0.0
      %1075 = vmatprep.subr.mxu0 0.0
      %1076 = vmatpush2.msra.mxu0 0.0
      %1077 = vmatprep.mubr.f32.mxu0 0.0
      %1078 = vmatmul.mubr.f32.gmra.mxu0 %v1011
      %v1079 = vpop.f32.mrf.mxu0
      %v1080 = vadd.f32 %v1007, %v1079
      %v1081 = vpop.f32.mrf.mxu0
      %1082 = vdwg.mxu0
      %v1083 = vadd.f32 %v1080, %v997
      %v1084 = vsel %vm1009, %v1083, 0.0
      %1085 = vadd.xlane.f32.xlu0 %v1084
      %v1086 = vpop.xlane.xlu0 %1085
      %v1087 = vrcp.pop 32.0
      %v1088 = vmul.f32 %v1086, %v1087
      %v1089 = vsub.f32 %v1083, %v1088
      %v1090 = vmul.f32 %v1089, %v1089
      %v1091 = vsel %vm1009, %v1090, 0.0
      %1092 = vadd.xlane.f32.xlu0 %v1091
      %v1093 = vpop.xlane.xlu0 %1092
      %v1094 = vmul.f32 %v1093, %v1087
      %v1095 = vadd.f32 %v1094, 1e-05
      %v1096 = vrsqrt.pop %v1095
      %v1097 = vmul.f32 %v1089, %v1096
      %v1098 = vld [vmem:[%s12] sm:$0x1]
      %v1100 = vlaneseq
      %v1101 = vshrl.u32 %v1100, 7
      %v1102 = vsub.s32 0, %v1101
      %v1103 = vrot.slane %v1098, %v1102
      %v1105 = vmul.f32 %v1097, %v1103
      %v1106 = vld [vmem:[%s13] sm:$0x1]
      %v1108 = vlaneseq
      %v1109 = vshrl.u32 %v1108, 7
      %v1110 = vsub.s32 0, %v1109
      %v1111 = vrot.slane %v1106, %v1110
      %v1113 = vadd.f32 %v1105, %v1111
      %1114 = vst.msk [vmem:[%s479] sm:$0xff] %vm1009, %v1113
      %p1115 = scmp.lt.s32.totalorder %s25, 1
      %s1116 = scalar_select %p1115, %s25, 1
      %s1117 = smul.addr %s1116, 8
      %s1118 = scalar_lea.vmem %s14, %s1117
      // Predicated region
      $region84: #{mab_forward.1} parent=75 // pred_check
        %p1119 = pneg %p347
      $region85: #{mab_forward.1} parent=75 // pred_check_branch
        %1121 = sbr.rel (%p1119) target = $region87
      $region86: #{mab_forward.1} parent=75 // pred_region
        _
      $region87: #{mab_forward.1} parent=75 // pred_fallthru
        _
    $region76: #{mab_forward.1} parent=5 // pred_fallthru
      _
    %p1122 = scmp.le.s32.totalorder 2, %s20
    // Predicated region
    $region88: #{mab_forward.1} parent=5 // pred_check
      %p1123 = pneg %p1122
    $region89: #{mab_forward.1} parent=5 // pred_check_branch
      %1125 = sbr.rel (%p1123) target = $region91
    $region90: #{mab_forward.1} parent=5 // pred_region
      %s1126 = ssub.s32 %s20, 2
      // Predicated region
      $region92: #{mab_forward.1} parent=90 // pred_check
        %p1127 = pneg %p353
      $region93: #{mab_forward.1} parent=90 // pred_check_branch
        %1129 = sbr.rel (%p1127) target = $region95
      $region94: #{mab_forward.1} parent=90 // pred_region
        %p1130 = scmp.lt.s32.totalorder %s26, 1
        %s1131 = scalar_select %p1130, %s26, 1
        %s1132 = smul.addr %s1131, 8
        %s1133 = scalar_lea.vmem %s14, %s1132
      $region95: #{mab_forward.1} parent=90 // pred_fallthru
        _
    $region91: #{mab_forward.1} parent=5 // pred_fallthru
      _
  $region6: #{mab_forward.1} parent=0 // loop_footer
    %s24 = sadd.s32 1, %s20
  $region7: #{mab_forward.1} parent=0 // loop_footer_branch
    %19 = sbr.rel target = $region3
  $region8: #{mab_forward.1} parent=0 // loop_exit
    _

</llo_original>
